<compile_context>
chip_gen: v6e
topology: v6e:2x2x1
jax: 0.10.0
libtpu: 0.0.40
codegen_flags: <defaults>
</compile_context>

<pallas_src>
import functools

import jax
import jax.numpy as jnp
from jax.experimental import pallas as pl
from jax.experimental.pallas import tpu as pltpu


def _ghost_conv_kernel(H, W, x_ref, w1_ref, w2_ref, s1_ref, b1_ref,
                       s2_ref, b2_ref, out_ref, ybuf_ref):
    HW = H * W
    PAD = 2 * W + 2                      # max flat tap shift (dy=+-2, dx=+-2)
    C_ = w1_ref.shape[0]

    # ---------------- primary branch: 1x1 conv (MXU) + folded BN + SiLU ----
    x = x_ref[0]                                              # (C1, HW)
    y = jnp.dot(w1_ref[...], x, preferred_element_type=jnp.float32)  # (C_, HW)
    y = y * s1_ref[...] + b1_ref[...]
    y = y * jax.nn.sigmoid(y)                                 # SiLU
    out_ref[0, :C_, :] = y.astype(out_ref.dtype)              # fused concat: slot 0

    # -------- cheap branch: 5x5 depthwise conv (pad=2) + folded BN + SiLU --
    ybuf_ref[...] = jnp.zeros_like(ybuf_ref)
    ybuf_ref[:, PAD:PAD + HW] = y
    ypad = ybuf_ref[...]                                      # (C_, HW + 2*PAD)
    w2 = w2_ref[...]                                          # (C_, 25)

    jcol = jax.lax.broadcasted_iota(jnp.int32, (1, HW), 1) % W
    z = jnp.zeros((C_, HW), jnp.float32)
    for dy in range(-2, 3):
        for dx in range(-2, 3):
            start = PAD + dy * W + dx                         # static lane offset
            tap = ypad[:, start:start + HW]
            if dx != 0:
                valid = jnp.logical_and(jcol + dx >= 0, jcol + dx < W)
                tap = jnp.where(valid, tap, 0.0)
            k = (dy + 2) * 5 + (dx + 2)
            z = z + w2[:, k:k + 1] * tap
    z = z * s2_ref[...] + b2_ref[...]
    z = z * jax.nn.sigmoid(z)                                 # SiLU
    out_ref[0, C_:, :] = z.astype(out_ref.dtype)              # fused concat: slot 1


def _fold_bn(gamma, beta, mean, var, eps):
    scale = gamma / jnp.sqrt(var + eps)
    bias = beta - mean * scale
    return (scale[:, None].astype(jnp.float32),
            bias[:, None].astype(jnp.float32))


def ghost_conv_pallas(x, params, eps=1e-5):
    """GhostConv forward pass. x: (N, C1, H, W) float32, NCHW (PyTorch layout)."""
    # TODO(synk): cv1 with k>1 / s>1 / groups>1 not implemented (GhostConv
    # default k=1, s=1, g=1 is what the module spec instantiates).
    N, C1, H, W = x.shape
    w1 = params["w1"].astype(jnp.float32)            # (C_, C1)   1x1 conv
    w2 = params["w2"].astype(jnp.float32)            # (C_, 5, 5) depthwise conv
    C_ = w1.shape[0]
    HW = H * W
    PAD = 2 * W + 2

    s1, b1 = _fold_bn(params["g1"], params["b1"], params["m1"], params["v1"], eps)
    s2, b2 = _fold_bn(params["g2"], params["b2"], params["m2"], params["v2"], eps)
    w2f = w2.reshape(C_, 25)
    x_flat = x.reshape(N, C1, HW)                    # lane-dense last dim

    kernel = functools.partial(_ghost_conv_kernel, H, W)
    out_flat = pl.pallas_call(
        kernel,
        out_shape=jax.ShapeDtypeStruct((N, 2 * C_, HW), x.dtype),
        grid_spec=pltpu.PrefetchScalarGridSpec(
            num_scalar_prefetch=0,
            grid=(N,),
            in_specs=[
                pl.BlockSpec((1, C1, HW), lambda n: (n, 0, 0)),   # x
                pl.BlockSpec((C_, C1), lambda n: (0, 0)),         # w1
                pl.BlockSpec((C_, 25), lambda n: (0, 0)),         # w2 (flat)
                pl.BlockSpec((C_, 1), lambda n: (0, 0)),          # bn1 scale
                pl.BlockSpec((C_, 1), lambda n: (0, 0)),          # bn1 bias
                pl.BlockSpec((C_, 1), lambda n: (0, 0)),          # bn2 scale
                pl.BlockSpec((C_, 1), lambda n: (0, 0)),          # bn2 bias
            ],
            out_specs=pl.BlockSpec((1, 2 * C_, HW), lambda n: (n, 0, 0)),
            scratch_shapes=[pltpu.VMEM((C_, HW + 2 * PAD), jnp.float32)],
        ),
        compiler_params=pltpu.CompilerParams(
            dimension_semantics=("parallel",)),
    )(x_flat, w1, w2f, s1, b1, s2, b2)
    return out_flat.reshape(N, 2 * C_, H, W)


def _ghost_conv_reference(x, params, eps=1e-5):
    """Pure-JAX reference matching PyTorch GhostConv (inference BN)."""
    dn = ("NCHW", "OIHW", "NCHW")
    w1 = params["w1"]
    w2 = params["w2"]
    C_ = w1.shape[0]

    def bn(t, g, b, m, v):
        s = g / jnp.sqrt(v + eps)
        return (t - m[None, :, None, None]) * s[None, :, None, None] \
            + b[None, :, None, None]

    y = jax.lax.conv_general_dilated(
        x, w1[:, :, None, None], (1, 1), "VALID",
        dimension_numbers=dn, precision=jax.lax.Precision.HIGHEST)
    y = bn(y, params["g1"], params["b1"], params["m1"], params["v1"])
    y = y * jax.nn.sigmoid(y)

    z = jax.lax.conv_general_dilated(
        y, w2[:, None, :, :], (1, 1), ((2, 2), (2, 2)),
        dimension_numbers=dn, feature_group_count=C_,
        precision=jax.lax.Precision.HIGHEST)
    z = bn(z, params["g2"], params["b2"], params["m2"], params["v2"])
    z = z * jax.nn.sigmoid(z)
    return jnp.concatenate([y, z], axis=1)


if __name__ == "__main__":
    key = jax.random.PRNGKey(0)
    ks = jax.random.split(key, 11)

    # GhostConv(c1=8, c2=16): c_ = 8; input N=2, H=W=16 (H*W = 256 lanes).
    N, C1, H, W = 2, 8, 16, 16
    c2 = 16
    C_ = c2 // 2

    x = jax.random.normal(ks[0], (N, C1, H, W), dtype=jnp.float32)
    params = {
        "w1": 0.3 * jax.random.normal(ks[1], (C_, C1), dtype=jnp.float32),
        "w2": 0.2 * jax.random.normal(ks[2], (C_, 5, 5), dtype=jnp.float32),
        "g1": 1.0 + 0.1 * jax.random.normal(ks[3], (C_,), dtype=jnp.float32),
        "b1": 0.1 * jax.random.normal(ks[4], (C_,), dtype=jnp.float32),
        "m1": 0.1 * jax.random.normal(ks[5], (C_,), dtype=jnp.float32),
        "v1": jax.random.uniform(ks[6], (C_,), jnp.float32, 0.5, 1.5),
        "g2": 1.0 + 0.1 * jax.random.normal(ks[7], (C_,), dtype=jnp.float32),
        "b2": 0.1 * jax.random.normal(ks[8], (C_,), dtype=jnp.float32),
        "m2": 0.1 * jax.random.normal(ks[9], (C_,), dtype=jnp.float32),
        "v2": jax.random.uniform(ks[10], (C_,), jnp.float32, 0.5, 1.5),
    }

    out = ghost_conv_pallas(x, params)
    out = jax.block_until_ready(out)

    ref = _ghost_conv_reference(x, params)
    assert out.shape == (N, 2 * C_, H, W), out.shape
    assert out.dtype == ref.dtype
    max_err = float(jnp.max(jnp.abs(out - ref)))
    assert jnp.allclose(out, ref, atol=1e-3, rtol=1e-3), max_err

    print("KERNEL_OK")
</pallas_src>

<mosaic_0001>
module attributes {stable_mosaic.version = 11 : i64} {
  func.func @_ghost_conv_kernel(%arg0: i32, %arg1: memref<1x8x256xf32, #tpu.memory_space<vmem>>, %arg2: memref<8x8xf32, #tpu.memory_space<vmem>>, %arg3: memref<8x25xf32, #tpu.memory_space<vmem>>, %arg4: memref<8x1xf32, #tpu.memory_space<vmem>>, %arg5: memref<8x1xf32, #tpu.memory_space<vmem>>, %arg6: memref<8x1xf32, #tpu.memory_space<vmem>>, %arg7: memref<8x1xf32, #tpu.memory_space<vmem>>, %arg8: memref<1x16x256xf32, #tpu.memory_space<vmem>>, %arg9: memref<8x324xf32, #tpu.memory_space<vmem>>) attributes {dimension_semantics = [#tpu.dimension_semantics<parallel>], iteration_bounds = array<i64: 2>, scalar_prefetch = 0 : i64, scratch_operands = 1 : i64, tpu.core_type = #tpu.core_type<tc>, window_params = [{transform_indices = @transform_0, window_bounds = array<i64: 1, 8, 256>}, {pipeline_mode = #tpu.pipeline_mode<synchronous>, transform_indices = @transform_1, window_bounds = array<i64: 8, 8>}, {pipeline_mode = #tpu.pipeline_mode<synchronous>, transform_indices = @transform_2, window_bounds = array<i64: 8, 25>}, {pipeline_mode = #tpu.pipeline_mode<synchronous>, transform_indices = @transform_3, window_bounds = array<i64: 8, 1>}, {pipeline_mode = #tpu.pipeline_mode<synchronous>, transform_indices = @transform_4, window_bounds = array<i64: 8, 1>}, {pipeline_mode = #tpu.pipeline_mode<synchronous>, transform_indices = @transform_5, window_bounds = array<i64: 8, 1>}, {pipeline_mode = #tpu.pipeline_mode<synchronous>, transform_indices = @transform_6, window_bounds = array<i64: 8, 1>}, {transform_indices = @transform_7, window_bounds = array<i64: 1, 16, 256>}]} {
    %c0 = arith.constant 0 : index
    %c0_0 = arith.constant 0 : index
    %c0_1 = arith.constant 0 : index
    %0 = vector.load %arg1[%c0, %c0_0, %c0_1] : memref<1x8x256xf32, #tpu.memory_space<vmem>>, vector<1x8x256xf32>
    %1 = vector.shape_cast %0 : vector<1x8x256xf32> to vector<8x256xf32>
    %c0_2 = arith.constant 0 : index
    %c0_3 = arith.constant 0 : index
    %2 = vector.load %arg2[%c0_2, %c0_3] : memref<8x8xf32, #tpu.memory_space<vmem>>, vector<8x8xf32>
    %cst = arith.constant dense<0.000000e+00> : vector<8x256xf32>
    %3 = tpu.matmul %2, %1, %cst {dimension_numbers = #tpu.dot_dimension_numbers<[1], [0], [0], [1], [0, 0, 1, 1], [], []>} : vector<8x8xf32>, vector<8x256xf32>, vector<8x256xf32> -> vector<8x256xf32>
    %c0_4 = arith.constant 0 : index
    %c0_5 = arith.constant 0 : index
    %4 = vector.load %arg4[%c0_4, %c0_5] : memref<8x1xf32, #tpu.memory_space<vmem>>, vector<8x1xf32>
    %5 = vector.broadcast %4 : vector<8x1xf32> to vector<8x256xf32>
    %6 = arith.mulf %3, %5 : vector<8x256xf32>
    %c0_6 = arith.constant 0 : index
    %c0_7 = arith.constant 0 : index
    %7 = vector.load %arg5[%c0_6, %c0_7] : memref<8x1xf32, #tpu.memory_space<vmem>>, vector<8x1xf32>
    %8 = vector.broadcast %7 : vector<8x1xf32> to vector<8x256xf32>
    %9 = arith.addf %6, %8 : vector<8x256xf32>
    %10 = arith.negf %9 : vector<8x256xf32>
    %11 = math.exp %10 : vector<8x256xf32>
    %cst_8 = arith.constant 1.000000e+00 : f32
    %12 = vector.broadcast %cst_8 : f32 to vector<8x256xf32>
    %13 = arith.addf %12, %11 : vector<8x256xf32>
    %14 = arith.divf %12, %13 : vector<8x256xf32>
    %15 = arith.mulf %9, %14 : vector<8x256xf32>
    %c0_9 = arith.constant 0 : index
    %c0_10 = arith.constant 0 : index
    %c0_11 = arith.constant 0 : index
    %16 = vector.load %arg8[%c0_9, %c0_10, %c0_11] : memref<1x16x256xf32, #tpu.memory_space<vmem>>, vector<1x8x256xf32>
    %17 = vector.shape_cast %16 : vector<1x8x256xf32> to vector<8x256xf32>
    %18 = vector.shape_cast %15 : vector<8x256xf32> to vector<1x8x256xf32>
    tpu.vector_store %arg8[%c0_9, %c0_10, %c0_11], %18 {strides = array<i32>} : memref<1x16x256xf32, #tpu.memory_space<vmem>>, vector<1x8x256xf32>,
    %cst_12 = arith.constant 0.000000e+00 : f32
    %19 = vector.broadcast %cst_12 : f32 to vector<8x324xf32>
    %c0_13 = arith.constant 0 : index
    %c0_14 = arith.constant 0 : index
    %20 = vector.load %arg9[%c0_13, %c0_14] : memref<8x324xf32, #tpu.memory_space<vmem>>, vector<8x324xf32>
    tpu.vector_store %arg9[%c0_13, %c0_14], %19 {strides = array<i32>} : memref<8x324xf32, #tpu.memory_space<vmem>>, vector<8x324xf32>,
    %c0_15 = arith.constant 0 : index
    %c34 = arith.constant 34 : index
    %21 = vector.load %arg9[%c0_15, %c34] : memref<8x324xf32, #tpu.memory_space<vmem>>, vector<8x256xf32>
    tpu.vector_store %arg9[%c0_15, %c34], %15 {strides = array<i32>} : memref<8x324xf32, #tpu.memory_space<vmem>>, vector<8x256xf32>,
    %c0_16 = arith.constant 0 : index
    %c0_17 = arith.constant 0 : index
    %22 = vector.load %arg9[%c0_16, %c0_17] : memref<8x324xf32, #tpu.memory_space<vmem>>, vector<8x324xf32>
    %c0_18 = arith.constant 0 : index
    %c0_19 = arith.constant 0 : index
    %23 = vector.load %arg3[%c0_18, %c0_19] : memref<8x25xf32, #tpu.memory_space<vmem>>, vector<8x25xf32>
    %24 = tpu.iota {dimensions = array<i32: 1>} : vector<1x256xi32>
    %c16_i32 = arith.constant 16 : i32
    %c0_i32 = arith.constant 0 : i32
    %25 = arith.cmpi eq, %c16_i32, %c0_i32 : i32
    %c1_i32 = arith.constant 1 : i32
    %26 = arith.select %25, %c1_i32, %c16_i32 : i32
    %27 = vector.broadcast %26 : i32 to vector<1x256xi32>
    %28 = arith.remsi %24, %27 : vector<1x256xi32>
    %c0_i32_20 = arith.constant 0 : i32
    %29 = vector.broadcast %c0_i32_20 : i32 to vector<1x256xi32>
    %30 = arith.cmpi ne, %28, %29 : vector<1x256xi32>
    %c0_i32_21 = arith.constant 0 : i32
    %31 = vector.broadcast %c0_i32_21 : i32 to vector<1x256xi32>
    %32 = arith.cmpi slt, %28, %31 : vector<1x256xi32>
    %c0_i32_22 = arith.constant 0 : i32
    %33 = arith.cmpi slt, %26, %c0_i32_22 : i32
    %34 = vector.broadcast %33 : i1 to vector<1x256xi1>
    %35 = vector.broadcast %34 : vector<1x256xi1> to vector<1x256xi1>
    %36 = arith.xori %32, %35 : vector<1x256xi1>
    %37 = arith.andi %36, %30 : vector<1x256xi1>
    %38 = vector.broadcast %26 : i32 to vector<1x256xi32>
    %39 = arith.addi %28, %38 : vector<1x256xi32>
    %40 = arith.select %37, %39, %28 : vector<1x256xi1>, vector<1x256xi32>
    %cst_23 = arith.constant 0.000000e+00 : f32
    %41 = vector.broadcast %cst_23 : f32 to vector<8x256xf32>
    %42 = vector.extract_strided_slice %22 {offsets = [0, 0], sizes = [8, 256], strides = [1, 1]} : vector<8x324xf32> to vector<8x256xf32>
    %c-2_i32 = arith.constant -2 : i32
    %43 = vector.broadcast %c-2_i32 : i32 to vector<1x256xi32>
    %44 = arith.addi %40, %43 : vector<1x256xi32>
    %c0_i32_24 = arith.constant 0 : i32
    %45 = vector.broadcast %c0_i32_24 : i32 to vector<1x256xi32>
    %46 = arith.cmpi sge, %44, %45 : vector<1x256xi32>
    %c-2_i32_25 = arith.constant -2 : i32
    %47 = vector.broadcast %c-2_i32_25 : i32 to vector<1x256xi32>
    %48 = arith.addi %40, %47 : vector<1x256xi32>
    %c16_i32_26 = arith.constant 16 : i32
    %49 = vector.broadcast %c16_i32_26 : i32 to vector<1x256xi32>
    %50 = arith.cmpi slt, %48, %49 : vector<1x256xi32>
    %51 = arith.andi %46, %50 : vector<1x256xi1>
    %cst_27 = arith.constant 0.000000e+00 : f32
    %52 = vector.shape_cast %51 : vector<1x256xi1> to vector<1x256xi1>
    %53 = vector.broadcast %52 : vector<1x256xi1> to vector<8x256xi1>
    %54 = vector.broadcast %cst_27 : f32 to vector<8x256xf32>
    %55 = arith.select %53, %42, %54 : vector<8x256xi1>, vector<8x256xf32>
    %56 = vector.extract_strided_slice %23 {offsets = [0, 0], sizes = [8, 1], strides = [1, 1]} : vector<8x25xf32> to vector<8x1xf32>
    %57 = vector.broadcast %56 : vector<8x1xf32> to vector<8x256xf32>
    %58 = arith.mulf %57, %55 : vector<8x256xf32>
    %59 = arith.addf %41, %58 : vector<8x256xf32>
    %60 = vector.extract_strided_slice %22 {offsets = [0, 1], sizes = [8, 256], strides = [1, 1]} : vector<8x324xf32> to vector<8x256xf32>
    %c-1_i32 = arith.constant -1 : i32
    %61 = vector.broadcast %c-1_i32 : i32 to vector<1x256xi32>
    %62 = arith.addi %40, %61 : vector<1x256xi32>
    %c0_i32_28 = arith.constant 0 : i32
    %63 = vector.broadcast %c0_i32_28 : i32 to vector<1x256xi32>
    %64 = arith.cmpi sge, %62, %63 : vector<1x256xi32>
    %c-1_i32_29 = arith.constant -1 : i32
    %65 = vector.broadcast %c-1_i32_29 : i32 to vector<1x256xi32>
    %66 = arith.addi %40, %65 : vector<1x256xi32>
    %c16_i32_30 = arith.constant 16 : i32
    %67 = vector.broadcast %c16_i32_30 : i32 to vector<1x256xi32>
    %68 = arith.cmpi slt, %66, %67 : vector<1x256xi32>
    %69 = arith.andi %64, %68 : vector<1x256xi1>
    %cst_31 = arith.constant 0.000000e+00 : f32
    %70 = vector.shape_cast %69 : vector<1x256xi1> to vector<1x256xi1>
    %71 = vector.broadcast %70 : vector<1x256xi1> to vector<8x256xi1>
    %72 = vector.broadcast %cst_31 : f32 to vector<8x256xf32>
    %73 = arith.select %71, %60, %72 : vector<8x256xi1>, vector<8x256xf32>
    %74 = vector.extract_strided_slice %23 {offsets = [0, 1], sizes = [8, 1], strides = [1, 1]} : vector<8x25xf32> to vector<8x1xf32>
    %75 = vector.broadcast %74 : vector<8x1xf32> to vector<8x256xf32>
    %76 = arith.mulf %75, %73 : vector<8x256xf32>
    %77 = arith.addf %59, %76 : vector<8x256xf32>
    %78 = vector.extract_strided_slice %22 {offsets = [0, 2], sizes = [8, 256], strides = [1, 1]} : vector<8x324xf32> to vector<8x256xf32>
    %79 = vector.extract_strided_slice %23 {offsets = [0, 2], sizes = [8, 1], strides = [1, 1]} : vector<8x25xf32> to vector<8x1xf32>
    %80 = vector.broadcast %79 : vector<8x1xf32> to vector<8x256xf32>
    %81 = arith.mulf %80, %78 : vector<8x256xf32>
    %82 = arith.addf %77, %81 : vector<8x256xf32>
    %83 = vector.extract_strided_slice %22 {offsets = [0, 3], sizes = [8, 256], strides = [1, 1]} : vector<8x324xf32> to vector<8x256xf32>
    %c1_i32_32 = arith.constant 1 : i32
    %84 = vector.broadcast %c1_i32_32 : i32 to vector<1x256xi32>
    %85 = arith.addi %40, %84 : vector<1x256xi32>
    %c0_i32_33 = arith.constant 0 : i32
    %86 = vector.broadcast %c0_i32_33 : i32 to vector<1x256xi32>
    %87 = arith.cmpi sge, %85, %86 : vector<1x256xi32>
    %c1_i32_34 = arith.constant 1 : i32
    %88 = vector.broadcast %c1_i32_34 : i32 to vector<1x256xi32>
    %89 = arith.addi %40, %88 : vector<1x256xi32>
    %c16_i32_35 = arith.constant 16 : i32
    %90 = vector.broadcast %c16_i32_35 : i32 to vector<1x256xi32>
    %91 = arith.cmpi slt, %89, %90 : vector<1x256xi32>
    %92 = arith.andi %87, %91 : vector<1x256xi1>
    %cst_36 = arith.constant 0.000000e+00 : f32
    %93 = vector.shape_cast %92 : vector<1x256xi1> to vector<1x256xi1>
    %94 = vector.broadcast %93 : vector<1x256xi1> to vector<8x256xi1>
    %95 = vector.broadcast %cst_36 : f32 to vector<8x256xf32>
    %96 = arith.select %94, %83, %95 : vector<8x256xi1>, vector<8x256xf32>
    %97 = vector.extract_strided_slice %23 {offsets = [0, 3], sizes = [8, 1], strides = [1, 1]} : vector<8x25xf32> to vector<8x1xf32>
    %98 = vector.broadcast %97 : vector<8x1xf32> to vector<8x256xf32>
    %99 = arith.mulf %98, %96 : vector<8x256xf32>
    %100 = arith.addf %82, %99 : vector<8x256xf32>
    %101 = vector.extract_strided_slice %22 {offsets = [0, 4], sizes = [8, 256], strides = [1, 1]} : vector<8x324xf32> to vector<8x256xf32>
    %c2_i32 = arith.constant 2 : i32
    %102 = vector.broadcast %c2_i32 : i32 to vector<1x256xi32>
    %103 = arith.addi %40, %102 : vector<1x256xi32>
    %c0_i32_37 = arith.constant 0 : i32
    %104 = vector.broadcast %c0_i32_37 : i32 to vector<1x256xi32>
    %105 = arith.cmpi sge, %103, %104 : vector<1x256xi32>
    %c2_i32_38 = arith.constant 2 : i32
    %106 = vector.broadcast %c2_i32_38 : i32 to vector<1x256xi32>
    %107 = arith.addi %40, %106 : vector<1x256xi32>
    %c16_i32_39 = arith.constant 16 : i32
    %108 = vector.broadcast %c16_i32_39 : i32 to vector<1x256xi32>
    %109 = arith.cmpi slt, %107, %108 : vector<1x256xi32>
    %110 = arith.andi %105, %109 : vector<1x256xi1>
    %cst_40 = arith.constant 0.000000e+00 : f32
    %111 = vector.shape_cast %110 : vector<1x256xi1> to vector<1x256xi1>
    %112 = vector.broadcast %111 : vector<1x256xi1> to vector<8x256xi1>
    %113 = vector.broadcast %cst_40 : f32 to vector<8x256xf32>
    %114 = arith.select %112, %101, %113 : vector<8x256xi1>, vector<8x256xf32>
    %115 = vector.extract_strided_slice %23 {offsets = [0, 4], sizes = [8, 1], strides = [1, 1]} : vector<8x25xf32> to vector<8x1xf32>
    %116 = vector.broadcast %115 : vector<8x1xf32> to vector<8x256xf32>
    %117 = arith.mulf %116, %114 : vector<8x256xf32>
    %118 = arith.addf %100, %117 : vector<8x256xf32>
    %119 = vector.extract_strided_slice %22 {offsets = [0, 16], sizes = [8, 256], strides = [1, 1]} : vector<8x324xf32> to vector<8x256xf32>
    %c-2_i32_41 = arith.constant -2 : i32
    %120 = vector.broadcast %c-2_i32_41 : i32 to vector<1x256xi32>
    %121 = arith.addi %40, %120 : vector<1x256xi32>
    %c0_i32_42 = arith.constant 0 : i32
    %122 = vector.broadcast %c0_i32_42 : i32 to vector<1x256xi32>
    %123 = arith.cmpi sge, %121, %122 : vector<1x256xi32>
    %c-2_i32_43 = arith.constant -2 : i32
    %124 = vector.broadcast %c-2_i32_43 : i32 to vector<1x256xi32>
    %125 = arith.addi %40, %124 : vector<1x256xi32>
    %c16_i32_44 = arith.constant 16 : i32
    %126 = vector.broadcast %c16_i32_44 : i32 to vector<1x256xi32>
    %127 = arith.cmpi slt, %125, %126 : vector<1x256xi32>
    %128 = arith.andi %123, %127 : vector<1x256xi1>
    %cst_45 = arith.constant 0.000000e+00 : f32
    %129 = vector.shape_cast %128 : vector<1x256xi1> to vector<1x256xi1>
    %130 = vector.broadcast %129 : vector<1x256xi1> to vector<8x256xi1>
    %131 = vector.broadcast %cst_45 : f32 to vector<8x256xf32>
    %132 = arith.select %130, %119, %131 : vector<8x256xi1>, vector<8x256xf32>
    %133 = vector.extract_strided_slice %23 {offsets = [0, 5], sizes = [8, 1], strides = [1, 1]} : vector<8x25xf32> to vector<8x1xf32>
    %134 = vector.broadcast %133 : vector<8x1xf32> to vector<8x256xf32>
    %135 = arith.mulf %134, %132 : vector<8x256xf32>
    %136 = arith.addf %118, %135 : vector<8x256xf32>
    %137 = vector.extract_strided_slice %22 {offsets = [0, 17], sizes = [8, 256], strides = [1, 1]} : vector<8x324xf32> to vector<8x256xf32>
    %c-1_i32_46 = arith.constant -1 : i32
    %138 = vector.broadcast %c-1_i32_46 : i32 to vector<1x256xi32>
    %139 = arith.addi %40, %138 : vector<1x256xi32>
    %c0_i32_47 = arith.constant 0 : i32
    %140 = vector.broadcast %c0_i32_47 : i32 to vector<1x256xi32>
    %141 = arith.cmpi sge, %139, %140 : vector<1x256xi32>
    %c-1_i32_48 = arith.constant -1 : i32
    %142 = vector.broadcast %c-1_i32_48 : i32 to vector<1x256xi32>
    %143 = arith.addi %40, %142 : vector<1x256xi32>
    %c16_i32_49 = arith.constant 16 : i32
    %144 = vector.broadcast %c16_i32_49 : i32 to vector<1x256xi32>
    %145 = arith.cmpi slt, %143, %144 : vector<1x256xi32>
    %146 = arith.andi %141, %145 : vector<1x256xi1>
    %cst_50 = arith.constant 0.000000e+00 : f32
    %147 = vector.shape_cast %146 : vector<1x256xi1> to vector<1x256xi1>
    %148 = vector.broadcast %147 : vector<1x256xi1> to vector<8x256xi1>
    %149 = vector.broadcast %cst_50 : f32 to vector<8x256xf32>
    %150 = arith.select %148, %137, %149 : vector<8x256xi1>, vector<8x256xf32>
    %151 = vector.extract_strided_slice %23 {offsets = [0, 6], sizes = [8, 1], strides = [1, 1]} : vector<8x25xf32> to vector<8x1xf32>
    %152 = vector.broadcast %151 : vector<8x1xf32> to vector<8x256xf32>
    %153 = arith.mulf %152, %150 : vector<8x256xf32>
    %154 = arith.addf %136, %153 : vector<8x256xf32>
    %155 = vector.extract_strided_slice %22 {offsets = [0, 18], sizes = [8, 256], strides = [1, 1]} : vector<8x324xf32> to vector<8x256xf32>
    %156 = vector.extract_strided_slice %23 {offsets = [0, 7], sizes = [8, 1], strides = [1, 1]} : vector<8x25xf32> to vector<8x1xf32>
    %157 = vector.broadcast %156 : vector<8x1xf32> to vector<8x256xf32>
    %158 = arith.mulf %157, %155 : vector<8x256xf32>
    %159 = arith.addf %154, %158 : vector<8x256xf32>
    %160 = vector.extract_strided_slice %22 {offsets = [0, 19], sizes = [8, 256], strides = [1, 1]} : vector<8x324xf32> to vector<8x256xf32>
    %c1_i32_51 = arith.constant 1 : i32
    %161 = vector.broadcast %c1_i32_51 : i32 to vector<1x256xi32>
    %162 = arith.addi %40, %161 : vector<1x256xi32>
    %c0_i32_52 = arith.constant 0 : i32
    %163 = vector.broadcast %c0_i32_52 : i32 to vector<1x256xi32>
    %164 = arith.cmpi sge, %162, %163 : vector<1x256xi32>
    %c1_i32_53 = arith.constant 1 : i32
    %165 = vector.broadcast %c1_i32_53 : i32 to vector<1x256xi32>
    %166 = arith.addi %40, %165 : vector<1x256xi32>
    %c16_i32_54 = arith.constant 16 : i32
    %167 = vector.broadcast %c16_i32_54 : i32 to vector<1x256xi32>
    %168 = arith.cmpi slt, %166, %167 : vector<1x256xi32>
    %169 = arith.andi %164, %168 : vector<1x256xi1>
    %cst_55 = arith.constant 0.000000e+00 : f32
    %170 = vector.shape_cast %169 : vector<1x256xi1> to vector<1x256xi1>
    %171 = vector.broadcast %170 : vector<1x256xi1> to vector<8x256xi1>
    %172 = vector.broadcast %cst_55 : f32 to vector<8x256xf32>
    %173 = arith.select %171, %160, %172 : vector<8x256xi1>, vector<8x256xf32>
    %174 = vector.extract_strided_slice %23 {offsets = [0, 8], sizes = [8, 1], strides = [1, 1]} : vector<8x25xf32> to vector<8x1xf32>
    %175 = vector.broadcast %174 : vector<8x1xf32> to vector<8x256xf32>
    %176 = arith.mulf %175, %173 : vector<8x256xf32>
    %177 = arith.addf %159, %176 : vector<8x256xf32>
    %178 = vector.extract_strided_slice %22 {offsets = [0, 20], sizes = [8, 256], strides = [1, 1]} : vector<8x324xf32> to vector<8x256xf32>
    %c2_i32_56 = arith.constant 2 : i32
    %179 = vector.broadcast %c2_i32_56 : i32 to vector<1x256xi32>
    %180 = arith.addi %40, %179 : vector<1x256xi32>
    %c0_i32_57 = arith.constant 0 : i32
    %181 = vector.broadcast %c0_i32_57 : i32 to vector<1x256xi32>
    %182 = arith.cmpi sge, %180, %181 : vector<1x256xi32>
    %c2_i32_58 = arith.constant 2 : i32
    %183 = vector.broadcast %c2_i32_58 : i32 to vector<1x256xi32>
    %184 = arith.addi %40, %183 : vector<1x256xi32>
    %c16_i32_59 = arith.constant 16 : i32
    %185 = vector.broadcast %c16_i32_59 : i32 to vector<1x256xi32>
    %186 = arith.cmpi slt, %184, %185 : vector<1x256xi32>
    %187 = arith.andi %182, %186 : vector<1x256xi1>
    %cst_60 = arith.constant 0.000000e+00 : f32
    %188 = vector.shape_cast %187 : vector<1x256xi1> to vector<1x256xi1>
    %189 = vector.broadcast %188 : vector<1x256xi1> to vector<8x256xi1>
    %190 = vector.broadcast %cst_60 : f32 to vector<8x256xf32>
    %191 = arith.select %189, %178, %190 : vector<8x256xi1>, vector<8x256xf32>
    %192 = vector.extract_strided_slice %23 {offsets = [0, 9], sizes = [8, 1], strides = [1, 1]} : vector<8x25xf32> to vector<8x1xf32>
    %193 = vector.broadcast %192 : vector<8x1xf32> to vector<8x256xf32>
    %194 = arith.mulf %193, %191 : vector<8x256xf32>
    %195 = arith.addf %177, %194 : vector<8x256xf32>
    %196 = vector.extract_strided_slice %22 {offsets = [0, 32], sizes = [8, 256], strides = [1, 1]} : vector<8x324xf32> to vector<8x256xf32>
    %c-2_i32_61 = arith.constant -2 : i32
    %197 = vector.broadcast %c-2_i32_61 : i32 to vector<1x256xi32>
    %198 = arith.addi %40, %197 : vector<1x256xi32>
    %c0_i32_62 = arith.constant 0 : i32
    %199 = vector.broadcast %c0_i32_62 : i32 to vector<1x256xi32>
    %200 = arith.cmpi sge, %198, %199 : vector<1x256xi32>
    %c-2_i32_63 = arith.constant -2 : i32
    %201 = vector.broadcast %c-2_i32_63 : i32 to vector<1x256xi32>
    %202 = arith.addi %40, %201 : vector<1x256xi32>
    %c16_i32_64 = arith.constant 16 : i32
    %203 = vector.broadcast %c16_i32_64 : i32 to vector<1x256xi32>
    %204 = arith.cmpi slt, %202, %203 : vector<1x256xi32>
    %205 = arith.andi %200, %204 : vector<1x256xi1>
    %cst_65 = arith.constant 0.000000e+00 : f32
    %206 = vector.shape_cast %205 : vector<1x256xi1> to vector<1x256xi1>
    %207 = vector.broadcast %206 : vector<1x256xi1> to vector<8x256xi1>
    %208 = vector.broadcast %cst_65 : f32 to vector<8x256xf32>
    %209 = arith.select %207, %196, %208 : vector<8x256xi1>, vector<8x256xf32>
    %210 = vector.extract_strided_slice %23 {offsets = [0, 10], sizes = [8, 1], strides = [1, 1]} : vector<8x25xf32> to vector<8x1xf32>
    %211 = vector.broadcast %210 : vector<8x1xf32> to vector<8x256xf32>
    %212 = arith.mulf %211, %209 : vector<8x256xf32>
    %213 = arith.addf %195, %212 : vector<8x256xf32>
    %214 = vector.extract_strided_slice %22 {offsets = [0, 33], sizes = [8, 256], strides = [1, 1]} : vector<8x324xf32> to vector<8x256xf32>
    %c-1_i32_66 = arith.constant -1 : i32
    %215 = vector.broadcast %c-1_i32_66 : i32 to vector<1x256xi32>
    %216 = arith.addi %40, %215 : vector<1x256xi32>
    %c0_i32_67 = arith.constant 0 : i32
    %217 = vector.broadcast %c0_i32_67 : i32 to vector<1x256xi32>
    %218 = arith.cmpi sge, %216, %217 : vector<1x256xi32>
    %c-1_i32_68 = arith.constant -1 : i32
    %219 = vector.broadcast %c-1_i32_68 : i32 to vector<1x256xi32>
    %220 = arith.addi %40, %219 : vector<1x256xi32>
    %c16_i32_69 = arith.constant 16 : i32
    %221 = vector.broadcast %c16_i32_69 : i32 to vector<1x256xi32>
    %222 = arith.cmpi slt, %220, %221 : vector<1x256xi32>
    %223 = arith.andi %218, %222 : vector<1x256xi1>
    %cst_70 = arith.constant 0.000000e+00 : f32
    %224 = vector.shape_cast %223 : vector<1x256xi1> to vector<1x256xi1>
    %225 = vector.broadcast %224 : vector<1x256xi1> to vector<8x256xi1>
    %226 = vector.broadcast %cst_70 : f32 to vector<8x256xf32>
    %227 = arith.select %225, %214, %226 : vector<8x256xi1>, vector<8x256xf32>
    %228 = vector.extract_strided_slice %23 {offsets = [0, 11], sizes = [8, 1], strides = [1, 1]} : vector<8x25xf32> to vector<8x1xf32>
    %229 = vector.broadcast %228 : vector<8x1xf32> to vector<8x256xf32>
    %230 = arith.mulf %229, %227 : vector<8x256xf32>
    %231 = arith.addf %213, %230 : vector<8x256xf32>
    %232 = vector.extract_strided_slice %22 {offsets = [0, 34], sizes = [8, 256], strides = [1, 1]} : vector<8x324xf32> to vector<8x256xf32>
    %233 = vector.extract_strided_slice %23 {offsets = [0, 12], sizes = [8, 1], strides = [1, 1]} : vector<8x25xf32> to vector<8x1xf32>
    %234 = vector.broadcast %233 : vector<8x1xf32> to vector<8x256xf32>
    %235 = arith.mulf %234, %232 : vector<8x256xf32>
    %236 = arith.addf %231, %235 : vector<8x256xf32>
    %237 = vector.extract_strided_slice %22 {offsets = [0, 35], sizes = [8, 256], strides = [1, 1]} : vector<8x324xf32> to vector<8x256xf32>
    %c1_i32_71 = arith.constant 1 : i32
    %238 = vector.broadcast %c1_i32_71 : i32 to vector<1x256xi32>
    %239 = arith.addi %40, %238 : vector<1x256xi32>
    %c0_i32_72 = arith.constant 0 : i32
    %240 = vector.broadcast %c0_i32_72 : i32 to vector<1x256xi32>
    %241 = arith.cmpi sge, %239, %240 : vector<1x256xi32>
    %c1_i32_73 = arith.constant 1 : i32
    %242 = vector.broadcast %c1_i32_73 : i32 to vector<1x256xi32>
    %243 = arith.addi %40, %242 : vector<1x256xi32>
    %c16_i32_74 = arith.constant 16 : i32
    %244 = vector.broadcast %c16_i32_74 : i32 to vector<1x256xi32>
    %245 = arith.cmpi slt, %243, %244 : vector<1x256xi32>
    %246 = arith.andi %241, %245 : vector<1x256xi1>
    %cst_75 = arith.constant 0.000000e+00 : f32
    %247 = vector.shape_cast %246 : vector<1x256xi1> to vector<1x256xi1>
    %248 = vector.broadcast %247 : vector<1x256xi1> to vector<8x256xi1>
    %249 = vector.broadcast %cst_75 : f32 to vector<8x256xf32>
    %250 = arith.select %248, %237, %249 : vector<8x256xi1>, vector<8x256xf32>
    %251 = vector.extract_strided_slice %23 {offsets = [0, 13], sizes = [8, 1], strides = [1, 1]} : vector<8x25xf32> to vector<8x1xf32>
    %252 = vector.broadcast %251 : vector<8x1xf32> to vector<8x256xf32>
    %253 = arith.mulf %252, %250 : vector<8x256xf32>
    %254 = arith.addf %236, %253 : vector<8x256xf32>
    %255 = vector.extract_strided_slice %22 {offsets = [0, 36], sizes = [8, 256], strides = [1, 1]} : vector<8x324xf32> to vector<8x256xf32>
    %c2_i32_76 = arith.constant 2 : i32
    %256 = vector.broadcast %c2_i32_76 : i32 to vector<1x256xi32>
    %257 = arith.addi %40, %256 : vector<1x256xi32>
    %c0_i32_77 = arith.constant 0 : i32
    %258 = vector.broadcast %c0_i32_77 : i32 to vector<1x256xi32>
    %259 = arith.cmpi sge, %257, %258 : vector<1x256xi32>
    %c2_i32_78 = arith.constant 2 : i32
    %260 = vector.broadcast %c2_i32_78 : i32 to vector<1x256xi32>
    %261 = arith.addi %40, %260 : vector<1x256xi32>
    %c16_i32_79 = arith.constant 16 : i32
    %262 = vector.broadcast %c16_i32_79 : i32 to vector<1x256xi32>
    %263 = arith.cmpi slt, %261, %262 : vector<1x256xi32>
    %264 = arith.andi %259, %263 : vector<1x256xi1>
    %cst_80 = arith.constant 0.000000e+00 : f32
    %265 = vector.shape_cast %264 : vector<1x256xi1> to vector<1x256xi1>
    %266 = vector.broadcast %265 : vector<1x256xi1> to vector<8x256xi1>
    %267 = vector.broadcast %cst_80 : f32 to vector<8x256xf32>
    %268 = arith.select %266, %255, %267 : vector<8x256xi1>, vector<8x256xf32>
    %269 = vector.extract_strided_slice %23 {offsets = [0, 14], sizes = [8, 1], strides = [1, 1]} : vector<8x25xf32> to vector<8x1xf32>
    %270 = vector.broadcast %269 : vector<8x1xf32> to vector<8x256xf32>
    %271 = arith.mulf %270, %268 : vector<8x256xf32>
    %272 = arith.addf %254, %271 : vector<8x256xf32>
    %273 = vector.extract_strided_slice %22 {offsets = [0, 48], sizes = [8, 256], strides = [1, 1]} : vector<8x324xf32> to vector<8x256xf32>
    %c-2_i32_81 = arith.constant -2 : i32
    %274 = vector.broadcast %c-2_i32_81 : i32 to vector<1x256xi32>
    %275 = arith.addi %40, %274 : vector<1x256xi32>
    %c0_i32_82 = arith.constant 0 : i32
    %276 = vector.broadcast %c0_i32_82 : i32 to vector<1x256xi32>
    %277 = arith.cmpi sge, %275, %276 : vector<1x256xi32>
    %c-2_i32_83 = arith.constant -2 : i32
    %278 = vector.broadcast %c-2_i32_83 : i32 to vector<1x256xi32>
    %279 = arith.addi %40, %278 : vector<1x256xi32>
    %c16_i32_84 = arith.constant 16 : i32
    %280 = vector.broadcast %c16_i32_84 : i32 to vector<1x256xi32>
    %281 = arith.cmpi slt, %279, %280 : vector<1x256xi32>
    %282 = arith.andi %277, %281 : vector<1x256xi1>
    %cst_85 = arith.constant 0.000000e+00 : f32
    %283 = vector.shape_cast %282 : vector<1x256xi1> to vector<1x256xi1>
    %284 = vector.broadcast %283 : vector<1x256xi1> to vector<8x256xi1>
    %285 = vector.broadcast %cst_85 : f32 to vector<8x256xf32>
    %286 = arith.select %284, %273, %285 : vector<8x256xi1>, vector<8x256xf32>
    %287 = vector.extract_strided_slice %23 {offsets = [0, 15], sizes = [8, 1], strides = [1, 1]} : vector<8x25xf32> to vector<8x1xf32>
    %288 = vector.broadcast %287 : vector<8x1xf32> to vector<8x256xf32>
    %289 = arith.mulf %288, %286 : vector<8x256xf32>
    %290 = arith.addf %272, %289 : vector<8x256xf32>
    %291 = vector.extract_strided_slice %22 {offsets = [0, 49], sizes = [8, 256], strides = [1, 1]} : vector<8x324xf32> to vector<8x256xf32>
    %c-1_i32_86 = arith.constant -1 : i32
    %292 = vector.broadcast %c-1_i32_86 : i32 to vector<1x256xi32>
    %293 = arith.addi %40, %292 : vector<1x256xi32>
    %c0_i32_87 = arith.constant 0 : i32
    %294 = vector.broadcast %c0_i32_87 : i32 to vector<1x256xi32>
    %295 = arith.cmpi sge, %293, %294 : vector<1x256xi32>
    %c-1_i32_88 = arith.constant -1 : i32
    %296 = vector.broadcast %c-1_i32_88 : i32 to vector<1x256xi32>
    %297 = arith.addi %40, %296 : vector<1x256xi32>
    %c16_i32_89 = arith.constant 16 : i32
    %298 = vector.broadcast %c16_i32_89 : i32 to vector<1x256xi32>
    %299 = arith.cmpi slt, %297, %298 : vector<1x256xi32>
    %300 = arith.andi %295, %299 : vector<1x256xi1>
    %cst_90 = arith.constant 0.000000e+00 : f32
    %301 = vector.shape_cast %300 : vector<1x256xi1> to vector<1x256xi1>
    %302 = vector.broadcast %301 : vector<1x256xi1> to vector<8x256xi1>
    %303 = vector.broadcast %cst_90 : f32 to vector<8x256xf32>
    %304 = arith.select %302, %291, %303 : vector<8x256xi1>, vector<8x256xf32>
    %305 = vector.extract_strided_slice %23 {offsets = [0, 16], sizes = [8, 1], strides = [1, 1]} : vector<8x25xf32> to vector<8x1xf32>
    %306 = vector.broadcast %305 : vector<8x1xf32> to vector<8x256xf32>
    %307 = arith.mulf %306, %304 : vector<8x256xf32>
    %308 = arith.addf %290, %307 : vector<8x256xf32>
    %309 = vector.extract_strided_slice %22 {offsets = [0, 50], sizes = [8, 256], strides = [1, 1]} : vector<8x324xf32> to vector<8x256xf32>
    %310 = vector.extract_strided_slice %23 {offsets = [0, 17], sizes = [8, 1], strides = [1, 1]} : vector<8x25xf32> to vector<8x1xf32>
    %311 = vector.broadcast %310 : vector<8x1xf32> to vector<8x256xf32>
    %312 = arith.mulf %311, %309 : vector<8x256xf32>
    %313 = arith.addf %308, %312 : vector<8x256xf32>
    %314 = vector.extract_strided_slice %22 {offsets = [0, 51], sizes = [8, 256], strides = [1, 1]} : vector<8x324xf32> to vector<8x256xf32>
    %c1_i32_91 = arith.constant 1 : i32
    %315 = vector.broadcast %c1_i32_91 : i32 to vector<1x256xi32>
    %316 = arith.addi %40, %315 : vector<1x256xi32>
    %c0_i32_92 = arith.constant 0 : i32
    %317 = vector.broadcast %c0_i32_92 : i32 to vector<1x256xi32>
    %318 = arith.cmpi sge, %316, %317 : vector<1x256xi32>
    %c1_i32_93 = arith.constant 1 : i32
    %319 = vector.broadcast %c1_i32_93 : i32 to vector<1x256xi32>
    %320 = arith.addi %40, %319 : vector<1x256xi32>
    %c16_i32_94 = arith.constant 16 : i32
    %321 = vector.broadcast %c16_i32_94 : i32 to vector<1x256xi32>
    %322 = arith.cmpi slt, %320, %321 : vector<1x256xi32>
    %323 = arith.andi %318, %322 : vector<1x256xi1>
    %cst_95 = arith.constant 0.000000e+00 : f32
    %324 = vector.shape_cast %323 : vector<1x256xi1> to vector<1x256xi1>
    %325 = vector.broadcast %324 : vector<1x256xi1> to vector<8x256xi1>
    %326 = vector.broadcast %cst_95 : f32 to vector<8x256xf32>
    %327 = arith.select %325, %314, %326 : vector<8x256xi1>, vector<8x256xf32>
    %328 = vector.extract_strided_slice %23 {offsets = [0, 18], sizes = [8, 1], strides = [1, 1]} : vector<8x25xf32> to vector<8x1xf32>
    %329 = vector.broadcast %328 : vector<8x1xf32> to vector<8x256xf32>
    %330 = arith.mulf %329, %327 : vector<8x256xf32>
    %331 = arith.addf %313, %330 : vector<8x256xf32>
    %332 = vector.extract_strided_slice %22 {offsets = [0, 52], sizes = [8, 256], strides = [1, 1]} : vector<8x324xf32> to vector<8x256xf32>
    %c2_i32_96 = arith.constant 2 : i32
    %333 = vector.broadcast %c2_i32_96 : i32 to vector<1x256xi32>
    %334 = arith.addi %40, %333 : vector<1x256xi32>
    %c0_i32_97 = arith.constant 0 : i32
    %335 = vector.broadcast %c0_i32_97 : i32 to vector<1x256xi32>
    %336 = arith.cmpi sge, %334, %335 : vector<1x256xi32>
    %c2_i32_98 = arith.constant 2 : i32
    %337 = vector.broadcast %c2_i32_98 : i32 to vector<1x256xi32>
    %338 = arith.addi %40, %337 : vector<1x256xi32>
    %c16_i32_99 = arith.constant 16 : i32
    %339 = vector.broadcast %c16_i32_99 : i32 to vector<1x256xi32>
    %340 = arith.cmpi slt, %338, %339 : vector<1x256xi32>
    %341 = arith.andi %336, %340 : vector<1x256xi1>
    %cst_100 = arith.constant 0.000000e+00 : f32
    %342 = vector.shape_cast %341 : vector<1x256xi1> to vector<1x256xi1>
    %343 = vector.broadcast %342 : vector<1x256xi1> to vector<8x256xi1>
    %344 = vector.broadcast %cst_100 : f32 to vector<8x256xf32>
    %345 = arith.select %343, %332, %344 : vector<8x256xi1>, vector<8x256xf32>
    %346 = vector.extract_strided_slice %23 {offsets = [0, 19], sizes = [8, 1], strides = [1, 1]} : vector<8x25xf32> to vector<8x1xf32>
    %347 = vector.broadcast %346 : vector<8x1xf32> to vector<8x256xf32>
    %348 = arith.mulf %347, %345 : vector<8x256xf32>
    %349 = arith.addf %331, %348 : vector<8x256xf32>
    %350 = vector.extract_strided_slice %22 {offsets = [0, 64], sizes = [8, 256], strides = [1, 1]} : vector<8x324xf32> to vector<8x256xf32>
    %c-2_i32_101 = arith.constant -2 : i32
    %351 = vector.broadcast %c-2_i32_101 : i32 to vector<1x256xi32>
    %352 = arith.addi %40, %351 : vector<1x256xi32>
    %c0_i32_102 = arith.constant 0 : i32
    %353 = vector.broadcast %c0_i32_102 : i32 to vector<1x256xi32>
    %354 = arith.cmpi sge, %352, %353 : vector<1x256xi32>
    %c-2_i32_103 = arith.constant -2 : i32
    %355 = vector.broadcast %c-2_i32_103 : i32 to vector<1x256xi32>
    %356 = arith.addi %40, %355 : vector<1x256xi32>
    %c16_i32_104 = arith.constant 16 : i32
    %357 = vector.broadcast %c16_i32_104 : i32 to vector<1x256xi32>
    %358 = arith.cmpi slt, %356, %357 : vector<1x256xi32>
    %359 = arith.andi %354, %358 : vector<1x256xi1>
    %cst_105 = arith.constant 0.000000e+00 : f32
    %360 = vector.shape_cast %359 : vector<1x256xi1> to vector<1x256xi1>
    %361 = vector.broadcast %360 : vector<1x256xi1> to vector<8x256xi1>
    %362 = vector.broadcast %cst_105 : f32 to vector<8x256xf32>
    %363 = arith.select %361, %350, %362 : vector<8x256xi1>, vector<8x256xf32>
    %364 = vector.extract_strided_slice %23 {offsets = [0, 20], sizes = [8, 1], strides = [1, 1]} : vector<8x25xf32> to vector<8x1xf32>
    %365 = vector.broadcast %364 : vector<8x1xf32> to vector<8x256xf32>
    %366 = arith.mulf %365, %363 : vector<8x256xf32>
    %367 = arith.addf %349, %366 : vector<8x256xf32>
    %368 = vector.extract_strided_slice %22 {offsets = [0, 65], sizes = [8, 256], strides = [1, 1]} : vector<8x324xf32> to vector<8x256xf32>
    %c-1_i32_106 = arith.constant -1 : i32
    %369 = vector.broadcast %c-1_i32_106 : i32 to vector<1x256xi32>
    %370 = arith.addi %40, %369 : vector<1x256xi32>
    %c0_i32_107 = arith.constant 0 : i32
    %371 = vector.broadcast %c0_i32_107 : i32 to vector<1x256xi32>
    %372 = arith.cmpi sge, %370, %371 : vector<1x256xi32>
    %c-1_i32_108 = arith.constant -1 : i32
    %373 = vector.broadcast %c-1_i32_108 : i32 to vector<1x256xi32>
    %374 = arith.addi %40, %373 : vector<1x256xi32>
    %c16_i32_109 = arith.constant 16 : i32
    %375 = vector.broadcast %c16_i32_109 : i32 to vector<1x256xi32>
    %376 = arith.cmpi slt, %374, %375 : vector<1x256xi32>
    %377 = arith.andi %372, %376 : vector<1x256xi1>
    %cst_110 = arith.constant 0.000000e+00 : f32
    %378 = vector.shape_cast %377 : vector<1x256xi1> to vector<1x256xi1>
    %379 = vector.broadcast %378 : vector<1x256xi1> to vector<8x256xi1>
    %380 = vector.broadcast %cst_110 : f32 to vector<8x256xf32>
    %381 = arith.select %379, %368, %380 : vector<8x256xi1>, vector<8x256xf32>
    %382 = vector.extract_strided_slice %23 {offsets = [0, 21], sizes = [8, 1], strides = [1, 1]} : vector<8x25xf32> to vector<8x1xf32>
    %383 = vector.broadcast %382 : vector<8x1xf32> to vector<8x256xf32>
    %384 = arith.mulf %383, %381 : vector<8x256xf32>
    %385 = arith.addf %367, %384 : vector<8x256xf32>
    %386 = vector.extract_strided_slice %22 {offsets = [0, 66], sizes = [8, 256], strides = [1, 1]} : vector<8x324xf32> to vector<8x256xf32>
    %387 = vector.extract_strided_slice %23 {offsets = [0, 22], sizes = [8, 1], strides = [1, 1]} : vector<8x25xf32> to vector<8x1xf32>
    %388 = vector.broadcast %387 : vector<8x1xf32> to vector<8x256xf32>
    %389 = arith.mulf %388, %386 : vector<8x256xf32>
    %390 = arith.addf %385, %389 : vector<8x256xf32>
    %391 = vector.extract_strided_slice %22 {offsets = [0, 67], sizes = [8, 256], strides = [1, 1]} : vector<8x324xf32> to vector<8x256xf32>
    %c1_i32_111 = arith.constant 1 : i32
    %392 = vector.broadcast %c1_i32_111 : i32 to vector<1x256xi32>
    %393 = arith.addi %40, %392 : vector<1x256xi32>
    %c0_i32_112 = arith.constant 0 : i32
    %394 = vector.broadcast %c0_i32_112 : i32 to vector<1x256xi32>
    %395 = arith.cmpi sge, %393, %394 : vector<1x256xi32>
    %c1_i32_113 = arith.constant 1 : i32
    %396 = vector.broadcast %c1_i32_113 : i32 to vector<1x256xi32>
    %397 = arith.addi %40, %396 : vector<1x256xi32>
    %c16_i32_114 = arith.constant 16 : i32
    %398 = vector.broadcast %c16_i32_114 : i32 to vector<1x256xi32>
    %399 = arith.cmpi slt, %397, %398 : vector<1x256xi32>
    %400 = arith.andi %395, %399 : vector<1x256xi1>
    %cst_115 = arith.constant 0.000000e+00 : f32
    %401 = vector.shape_cast %400 : vector<1x256xi1> to vector<1x256xi1>
    %402 = vector.broadcast %401 : vector<1x256xi1> to vector<8x256xi1>
    %403 = vector.broadcast %cst_115 : f32 to vector<8x256xf32>
    %404 = arith.select %402, %391, %403 : vector<8x256xi1>, vector<8x256xf32>
    %405 = vector.extract_strided_slice %23 {offsets = [0, 23], sizes = [8, 1], strides = [1, 1]} : vector<8x25xf32> to vector<8x1xf32>
    %406 = vector.broadcast %405 : vector<8x1xf32> to vector<8x256xf32>
    %407 = arith.mulf %406, %404 : vector<8x256xf32>
    %408 = arith.addf %390, %407 : vector<8x256xf32>
    %409 = vector.extract_strided_slice %22 {offsets = [0, 68], sizes = [8, 256], strides = [1, 1]} : vector<8x324xf32> to vector<8x256xf32>
    %c2_i32_116 = arith.constant 2 : i32
    %410 = vector.broadcast %c2_i32_116 : i32 to vector<1x256xi32>
    %411 = arith.addi %40, %410 : vector<1x256xi32>
    %c0_i32_117 = arith.constant 0 : i32
    %412 = vector.broadcast %c0_i32_117 : i32 to vector<1x256xi32>
    %413 = arith.cmpi sge, %411, %412 : vector<1x256xi32>
    %c2_i32_118 = arith.constant 2 : i32
    %414 = vector.broadcast %c2_i32_118 : i32 to vector<1x256xi32>
    %415 = arith.addi %40, %414 : vector<1x256xi32>
    %c16_i32_119 = arith.constant 16 : i32
    %416 = vector.broadcast %c16_i32_119 : i32 to vector<1x256xi32>
    %417 = arith.cmpi slt, %415, %416 : vector<1x256xi32>
    %418 = arith.andi %413, %417 : vector<1x256xi1>
    %cst_120 = arith.constant 0.000000e+00 : f32
    %419 = vector.shape_cast %418 : vector<1x256xi1> to vector<1x256xi1>
    %420 = vector.broadcast %419 : vector<1x256xi1> to vector<8x256xi1>
    %421 = vector.broadcast %cst_120 : f32 to vector<8x256xf32>
    %422 = arith.select %420, %409, %421 : vector<8x256xi1>, vector<8x256xf32>
    %423 = vector.extract_strided_slice %23 {offsets = [0, 24], sizes = [8, 1], strides = [1, 1]} : vector<8x25xf32> to vector<8x1xf32>
    %424 = vector.broadcast %423 : vector<8x1xf32> to vector<8x256xf32>
    %425 = arith.mulf %424, %422 : vector<8x256xf32>
    %426 = arith.addf %408, %425 : vector<8x256xf32>
    %c0_121 = arith.constant 0 : index
    %c0_122 = arith.constant 0 : index
    %427 = vector.load %arg6[%c0_121, %c0_122] : memref<8x1xf32, #tpu.memory_space<vmem>>, vector<8x1xf32>
    %428 = vector.broadcast %427 : vector<8x1xf32> to vector<8x256xf32>
    %429 = arith.mulf %426, %428 : vector<8x256xf32>
    %c0_123 = arith.constant 0 : index
    %c0_124 = arith.constant 0 : index
    %430 = vector.load %arg7[%c0_123, %c0_124] : memref<8x1xf32, #tpu.memory_space<vmem>>, vector<8x1xf32>
    %431 = vector.broadcast %430 : vector<8x1xf32> to vector<8x256xf32>
    %432 = arith.addf %429, %431 : vector<8x256xf32>
    %433 = arith.negf %432 : vector<8x256xf32>
    %434 = math.exp %433 : vector<8x256xf32>
    %cst_125 = arith.constant 1.000000e+00 : f32
    %435 = vector.broadcast %cst_125 : f32 to vector<8x256xf32>
    %436 = arith.addf %435, %434 : vector<8x256xf32>
    %437 = arith.divf %435, %436 : vector<8x256xf32>
    %438 = arith.mulf %432, %437 : vector<8x256xf32>
    %c0_126 = arith.constant 0 : index
    %c8 = arith.constant 8 : index
    %c0_127 = arith.constant 0 : index
    %439 = vector.load %arg8[%c0_126, %c8, %c0_127] : memref<1x16x256xf32, #tpu.memory_space<vmem>>, vector<1x8x256xf32>
    %440 = vector.shape_cast %439 : vector<1x8x256xf32> to vector<8x256xf32>
    %441 = vector.shape_cast %438 : vector<8x256xf32> to vector<1x8x256xf32>
    tpu.vector_store %arg8[%c0_126, %c8, %c0_127], %441 {strides = array<i32>} : memref<1x16x256xf32, #tpu.memory_space<vmem>>, vector<1x8x256xf32>,
    return
  }
  func.func @transform_0(%arg0: i32) -> (i32, i32, i32) {
    %c0_i32 = arith.constant 0 : i32
    %c0_i32_0 = arith.constant 0 : i32
    %c0_i32_1 = arith.constant 0 : i32
    return %arg0, %c0_i32, %c0_i32_0 : i32, i32, i32
  }
  func.func @transform_1(%arg0: i32) -> (i32, i32) {
    %c0_i32 = arith.constant 0 : i32
    %c0_i32_0 = arith.constant 0 : i32
    %c0_i32_1 = arith.constant 0 : i32
    return %c0_i32, %c0_i32_0 : i32, i32
  }
  func.func @transform_2(%arg0: i32) -> (i32, i32) {
    %c0_i32 = arith.constant 0 : i32
    %c0_i32_0 = arith.constant 0 : i32
    %c0_i32_1 = arith.constant 0 : i32
    return %c0_i32, %c0_i32_0 : i32, i32
  }
  func.func @transform_3(%arg0: i32) -> (i32, i32) {
    %c0_i32 = arith.constant 0 : i32
    %c0_i32_0 = arith.constant 0 : i32
    %c0_i32_1 = arith.constant 0 : i32
    return %c0_i32, %c0_i32_0 : i32, i32
  }
  func.func @transform_4(%arg0: i32) -> (i32, i32) {
    %c0_i32 = arith.constant 0 : i32
    %c0_i32_0 = arith.constant 0 : i32
    %c0_i32_1 = arith.constant 0 : i32
    return %c0_i32, %c0_i32_0 : i32, i32
  }
  func.func @transform_5(%arg0: i32) -> (i32, i32) {
    %c0_i32 = arith.constant 0 : i32
    %c0_i32_0 = arith.constant 0 : i32
    %c0_i32_1 = arith.constant 0 : i32
    return %c0_i32, %c0_i32_0 : i32, i32
  }
  func.func @transform_6(%arg0: i32) -> (i32, i32) {
    %c0_i32 = arith.constant 0 : i32
    %c0_i32_0 = arith.constant 0 : i32
    %c0_i32_1 = arith.constant 0 : i32
    return %c0_i32, %c0_i32_0 : i32, i32
  }
  func.func @transform_7(%arg0: i32) -> (i32, i32, i32) {
    %c0_i32 = arith.constant 0 : i32
    %c0_i32_0 = arith.constant 0 : i32
    %c0_i32_1 = arith.constant 0 : i32
    return %arg0, %c0_i32, %c0_i32_0 : i32, i32, i32
  }
}

</mosaic_0001>

<llo_original>
// kernel: tpu_custom_call.1
$region0: #{tpu_custom_call.1}
  #allocation0 [shape = 'u32[]', space=smem, size = 0x4, offset = 0x4, fixed_abs, tag = 'smem constant byte address 0x4 - core index']
  #allocation1 [shape = 'u32[144,128]{1,0:T(1,128)}', space=vmem, size = 0x12000, scoped, tag = 'internal scratch']
  #allocation2 [shape = 'f32[8,324]{1,0:T(8,128)}', space=vmem, size = 0x3000, scoped, tag = 'scratch operand']
  %s0 = inlined_call_operand.vmem [shape: f32[2,8,256], index: 0, kind: input, shape index: {}]
  %s1 = inlined_call_operand.hbm [shape: f32[8,8], index: 1, kind: input, shape index: {}]
  %s2 = inlined_call_operand.hbm [shape: f32[8,25], index: 2, kind: input, shape index: {}]
  %s3 = inlined_call_operand.vmem [shape: f32[8,1], index: 3, kind: input, shape index: {}]
  %s4 = inlined_call_operand.vmem [shape: f32[8,1], index: 4, kind: input, shape index: {}]
  %s5 = inlined_call_operand.vmem [shape: f32[8,1], index: 5, kind: input, shape index: {}]
  %s6 = inlined_call_operand.vmem [shape: f32[8,1], index: 6, kind: input, shape index: {}]
  %s7 = inlined_call_operand.hbm [shape: f32[2,16,256], index: 7, kind: output, shape index: {}]
  %s8 = sld [smem:[#allocation0]]
  $region69: #{tpu_custom_call.1} parent=0
    _
  %s10 = ssub.s32 1, %s8
  %s11 = scalar_select 0, %s10, %s8
  $region1: #{tpu_custom_call.1} parent=0
    #allocation3 [shape = 'u8[4096]{0}', space=vmem, size = 0x1000, scoped, tag = 'input window, operand 1, single buffered']
    #allocation4 [shape = 's32[2]{0}', space=sflag, size = 0x8, scoped, tag = 'scoped memory for tpu_custom_call.1']
    #allocation5 [shape = 's32[2]{0}', space=sflag, size = 0x8, scoped, tag = 'scoped memory for tpu_custom_call.1']
    #allocation6 [shape = 'u8[4096]{0}', space=vmem, size = 0x1000, scoped, tag = 'input window, operand 2, single buffered']
    #allocation7 [shape = 's32[1]{0}', space=sflag, size = 0x4, scoped, tag = 'scoped memory for tpu_custom_call.1']
    #allocation8 [shape = 'u8[32768]{0}', space=vmem, size = 0x8000, scoped, tag = 'output window, operand 0']
    %12 = vsyncpa [#allocation4], 0
    %13 = vsyncpa [#allocation7], 0
    %14 = vsyncpa [#allocation5], 0
    %s15 = scalar_lea.sflag [#allocation5], 1
    %16 = vsyncpa %s15, 0
    loop: start=0, step=1, limit=4
    $region2: #{tpu_custom_call.1} parent=1 // loop_pre_header
      _
    $region3: #{tpu_custom_call.1} parent=1 // loop_header
      %s18 = sphi 0, %s22
      %p19 = scmp.ge.s32.totalorder %s18, 4
      %s28 = sphi 0, %s30
      %s31 = sphi 0, %s28
      %s32 = sphi 0, %s31
      %s48 = sphi 0, %s32
      %s52 = sphi 0, %s52
      %s54 = sphi 0, %s52
      %s55 = sphi 0, %s54
      %s69 = sphi 0, %s55
      %s73 = sphi 0, %s73
      %s75 = sphi 0, %s73
      %s76 = sphi 0, %s75
      %s90 = sphi 0, %s76
      %s94 = sphi 0, %s94
      %s96 = sphi 0, %s94
      %s97 = sphi 0, %s96
      %s111 = sphi 0, %s97
      %s115 = sphi 0, %s115
      %s117 = sphi 0, %s115
      %s118 = sphi 0, %s117
      %s132 = sphi 0, %s118
      %s136 = sphi 0, %s136
      %s138 = sphi 0, %s136
      %s139 = sphi 0, %s138
      %s153 = sphi 0, %s139
      %s157 = sphi 0, %s157
      %s159 = sphi 0, %s157
      %s160 = sphi 0, %s159
      %s174 = sphi 0, %s160
      %s180 = sphi 0, %s182
      %s183 = sphi 0, %s180
      %s184 = sphi 0, %s183
      %s200 = sphi 0, %s184
    $region4: #{tpu_custom_call.1} parent=1 // loop_header_branch
      %21 = sbr.rel (%p19) target = $region8
    $region5: #{tpu_custom_call.1} parent=1 // loop_body
      %s23 = ssub.s32 %s18, 1
      %s24 = ssub.s32 %s18, 2
      %s25 = sadd.s32 %s18, 1
      %s26 = ssub.s32 %s18, %s25
      %p27 = scmp.eq.s32.totalorder %s26, 0
      %s29 = sadd.s32 %s28, 1
      %s30 = scalar_select %p27, %s28, %s29
      %p33 = pneg %p27
      %p34 = scmp.eq.s32.totalorder %s18, 1
      %p35 = por %p33, %p34
      %p36 = scmp.ne.s32.totalorder %s28, %s31
      %p37 = scmp.eq.s32.totalorder %s18, 0
      %p38 = por %p36, %p37
      %p39 = scmp.ne.s32.totalorder %s28, %s31
      %p40 = scmp.eq.s32.totalorder %s23, 1
      %p41 = por %p39, %p40
      %p42 = scmp.ne.s32.totalorder %s31, %s32
      %p43 = scmp.eq.s32.totalorder %s23, 0
      %p44 = por %p42, %p43
      %p45 = scmp.ne.s32.totalorder %s31, %s32
      %p46 = scmp.eq.s32.totalorder %s24, 1
      %p47 = por %p45, %p46
      %p49 = scmp.ne.s32.totalorder %s32, %s48
      %p50 = scmp.eq.s32.totalorder %s24, 0
      %p51 = por %p49, %p50
      %s53 = sadd.s32 %s52, 1
      %p56 = scmp.eq.s32.totalorder %s18, 1
      %p57 = scmp.ne.s32.totalorder %s52, %s54
      %p58 = scmp.eq.s32.totalorder %s18, 0
      %p59 = por %p57, %p58
      %p60 = scmp.ne.s32.totalorder %s52, %s54
      %p61 = scmp.eq.s32.totalorder %s23, 1
      %p62 = por %p60, %p61
      %p63 = scmp.ne.s32.totalorder %s54, %s55
      %p64 = scmp.eq.s32.totalorder %s23, 0
      %p65 = por %p63, %p64
      %p66 = scmp.ne.s32.totalorder %s54, %s55
      %p67 = scmp.eq.s32.totalorder %s24, 1
      %p68 = por %p66, %p67
      %p70 = scmp.ne.s32.totalorder %s55, %s69
      %p71 = scmp.eq.s32.totalorder %s24, 0
      %p72 = por %p70, %p71
      %s74 = sadd.s32 %s73, 1
      %p77 = scmp.eq.s32.totalorder %s18, 1
      %p78 = scmp.ne.s32.totalorder %s73, %s75
      %p79 = scmp.eq.s32.totalorder %s18, 0
      %p80 = por %p78, %p79
      %p81 = scmp.ne.s32.totalorder %s73, %s75
      %p82 = scmp.eq.s32.totalorder %s23, 1
      %p83 = por %p81, %p82
      %p84 = scmp.ne.s32.totalorder %s75, %s76
      %p85 = scmp.eq.s32.totalorder %s23, 0
      %p86 = por %p84, %p85
      %p87 = scmp.ne.s32.totalorder %s75, %s76
      %p88 = scmp.eq.s32.totalorder %s24, 1
      %p89 = por %p87, %p88
      %p91 = scmp.ne.s32.totalorder %s76, %s90
      %p92 = scmp.eq.s32.totalorder %s24, 0
      %p93 = por %p91, %p92
      %s95 = sadd.s32 %s94, 1
      %p98 = scmp.eq.s32.totalorder %s18, 1
      %p99 = scmp.ne.s32.totalorder %s94, %s96
      %p100 = scmp.eq.s32.totalorder %s18, 0
      %p101 = por %p99, %p100
      %p102 = scmp.ne.s32.totalorder %s94, %s96
      %p103 = scmp.eq.s32.totalorder %s23, 1
      %p104 = por %p102, %p103
      %p105 = scmp.ne.s32.totalorder %s96, %s97
      %p106 = scmp.eq.s32.totalorder %s23, 0
      %p107 = por %p105, %p106
      %p108 = scmp.ne.s32.totalorder %s96, %s97
      %p109 = scmp.eq.s32.totalorder %s24, 1
      %p110 = por %p108, %p109
      %p112 = scmp.ne.s32.totalorder %s97, %s111
      %p113 = scmp.eq.s32.totalorder %s24, 0
      %p114 = por %p112, %p113
      %s116 = sadd.s32 %s115, 1
      %p119 = scmp.eq.s32.totalorder %s18, 1
      %p120 = scmp.ne.s32.totalorder %s115, %s117
      %p121 = scmp.eq.s32.totalorder %s18, 0
      %p122 = por %p120, %p121
      %p123 = scmp.ne.s32.totalorder %s115, %s117
      %p124 = scmp.eq.s32.totalorder %s23, 1
      %p125 = por %p123, %p124
      %p126 = scmp.ne.s32.totalorder %s117, %s118
      %p127 = scmp.eq.s32.totalorder %s23, 0
      %p128 = por %p126, %p127
      %p129 = scmp.ne.s32.totalorder %s117, %s118
      %p130 = scmp.eq.s32.totalorder %s24, 1
      %p131 = por %p129, %p130
      %p133 = scmp.ne.s32.totalorder %s118, %s132
      %p134 = scmp.eq.s32.totalorder %s24, 0
      %p135 = por %p133, %p134
      %s137 = sadd.s32 %s136, 1
      %p140 = scmp.eq.s32.totalorder %s18, 1
      %p141 = scmp.ne.s32.totalorder %s136, %s138
      %p142 = scmp.eq.s32.totalorder %s18, 0
      %p143 = por %p141, %p142
      %p144 = scmp.ne.s32.totalorder %s136, %s138
      %p145 = scmp.eq.s32.totalorder %s23, 1
      %p146 = por %p144, %p145
      %p147 = scmp.ne.s32.totalorder %s138, %s139
      %p148 = scmp.eq.s32.totalorder %s23, 0
      %p149 = por %p147, %p148
      %p150 = scmp.ne.s32.totalorder %s138, %s139
      %p151 = scmp.eq.s32.totalorder %s24, 1
      %p152 = por %p150, %p151
      %p154 = scmp.ne.s32.totalorder %s139, %s153
      %p155 = scmp.eq.s32.totalorder %s24, 0
      %p156 = por %p154, %p155
      %s158 = sadd.s32 %s157, 1
      %p161 = scmp.eq.s32.totalorder %s18, 1
      %p162 = scmp.ne.s32.totalorder %s157, %s159
      %p163 = scmp.eq.s32.totalorder %s18, 0
      %p164 = por %p162, %p163
      %p165 = scmp.ne.s32.totalorder %s157, %s159
      %p166 = scmp.eq.s32.totalorder %s23, 1
      %p167 = por %p165, %p166
      %p168 = scmp.ne.s32.totalorder %s159, %s160
      %p169 = scmp.eq.s32.totalorder %s23, 0
      %p170 = por %p168, %p169
      %p171 = scmp.ne.s32.totalorder %s159, %s160
      %p172 = scmp.eq.s32.totalorder %s24, 1
      %p173 = por %p171, %p172
      %p175 = scmp.ne.s32.totalorder %s160, %s174
      %p176 = scmp.eq.s32.totalorder %s24, 0
      %p177 = por %p175, %p176
      %s178 = ssub.s32 %s18, %s25
      %p179 = scmp.eq.s32.totalorder %s178, 0
      %s181 = sadd.s32 %s180, 1
      %s182 = scalar_select %p179, %s180, %s181
      %p185 = pneg %p179
      %p186 = scmp.eq.s32.totalorder %s18, 1
      %p187 = por %p185, %p186
      %p188 = scmp.ne.s32.totalorder %s180, %s183
      %p189 = scmp.eq.s32.totalorder %s18, 0
      %p190 = por %p188, %p189
      %p191 = scmp.ne.s32.totalorder %s180, %s183
      %p192 = scmp.eq.s32.totalorder %s23, 1
      %p193 = por %p191, %p192
      %p194 = scmp.ne.s32.totalorder %s183, %s184
      %p195 = scmp.eq.s32.totalorder %s23, 0
      %p196 = por %p194, %p195
      %p197 = scmp.ne.s32.totalorder %s183, %s184
      %p198 = scmp.eq.s32.totalorder %s24, 1
      %p199 = por %p197, %p198
      %p201 = scmp.ne.s32.totalorder %s184, %s200
      %p202 = scmp.eq.s32.totalorder %s24, 0
      %p203 = por %p201, %p202
      %p204 = scmp.le.s32.totalorder 1, %s18
      %p205 = scmp.lt.s32.totalorder %s18, 3
      %p206 = pnand %p204, %p205
      %p207 = pneg %p206
      // Predicated region
      $region9: #{tpu_custom_call.1} parent=5 // pred_check
        _
      $region10: #{tpu_custom_call.1} parent=5 // pred_check_branch
        %209 = sbr.rel (%p206) target = $region12
      $region11: #{tpu_custom_call.1} parent=5 // pred_region
        %s210 = ssub.s32 %s18, 1
        // Predicated region
        $region13: #{tpu_custom_call.1} parent=11 // pred_check
          %p211 = pneg %p65
        $region14: #{tpu_custom_call.1} parent=11 // pred_check_branch
          %213 = sbr.rel (%p211) target = $region16
        $region15: #{tpu_custom_call.1} parent=11 // pred_region
          %s215 = ssub.s32 128, 128
          %216 = vsyncadd [#allocation4], %s215
          %s218 = sshll.u32 [#allocation3], 4
          %s219 = int_to_ptr.vmem [resolvable:$true] %s218
          %221 = dma.hbm_to_vmem [thread:$0]  %s1, 128, %s219, [#allocation4]
        $region16: #{tpu_custom_call.1} parent=11 // pred_fallthru
          _
        // Predicated region
        $region17: #{tpu_custom_call.1} parent=11 // pred_check
          %p222 = pneg %p86
        $region18: #{tpu_custom_call.1} parent=11 // pred_check_branch
          %224 = sbr.rel (%p222) target = $region20
        $region19: #{tpu_custom_call.1} parent=11 // pred_region
          %s226 = ssub.s32 128, 128
          %227 = vsyncadd [#allocation7], %s226
          %s229 = sshll.u32 [#allocation6], 4
          %s230 = int_to_ptr.vmem [resolvable:$true] %s229
          %232 = dma.hbm_to_vmem [thread:$0]  %s2, 128, %s230, [#allocation7]
        $region20: #{tpu_custom_call.1} parent=11 // pred_fallthru
          _
        // Predicated region
        $region21: #{tpu_custom_call.1} parent=11 // pred_check
          %p233 = pneg %p107
        $region22: #{tpu_custom_call.1} parent=11 // pred_check_branch
          %235 = sbr.rel (%p233) target = $region24
        $region23: #{tpu_custom_call.1} parent=11 // pred_region
          _
        $region24: #{tpu_custom_call.1} parent=11 // pred_fallthru
          _
        // Predicated region
        $region25: #{tpu_custom_call.1} parent=11 // pred_check
          %p236 = pneg %p128
        $region26: #{tpu_custom_call.1} parent=11 // pred_check_branch
          %238 = sbr.rel (%p236) target = $region28
        $region27: #{tpu_custom_call.1} parent=11 // pred_region
          _
        $region28: #{tpu_custom_call.1} parent=11 // pred_fallthru
          _
        // Predicated region
        $region29: #{tpu_custom_call.1} parent=11 // pred_check
          %p239 = pneg %p149
        $region30: #{tpu_custom_call.1} parent=11 // pred_check_branch
          %241 = sbr.rel (%p239) target = $region32
        $region31: #{tpu_custom_call.1} parent=11 // pred_region
          _
        $region32: #{tpu_custom_call.1} parent=11 // pred_fallthru
          _
        // Predicated region
        $region33: #{tpu_custom_call.1} parent=11 // pred_check
          %p242 = pneg %p170
        $region34: #{tpu_custom_call.1} parent=11 // pred_check_branch
          %244 = sbr.rel (%p242) target = $region36
        $region35: #{tpu_custom_call.1} parent=11 // pred_region
          _
        $region36: #{tpu_custom_call.1} parent=11 // pred_fallthru
          _
      $region12: #{tpu_custom_call.1} parent=5 // pred_fallthru
        _
      %p245 = scmp.lt.s32.totalorder %s18, 2
      // Predicated region
      $region37: #{tpu_custom_call.1} parent=5 // pred_check
        %p246 = pneg %p245
      $region38: #{tpu_custom_call.1} parent=5 // pred_check_branch
        %248 = sbr.rel (%p246) target = $region40
      $region39: #{tpu_custom_call.1} parent=5 // pred_region
        // Predicated region
        $region41: #{tpu_custom_call.1} parent=39 // pred_check
          %p249 = pneg %p38
        $region42: #{tpu_custom_call.1} parent=39 // pred_check_branch
          %251 = sbr.rel (%p249) target = $region44
        $region43: #{tpu_custom_call.1} parent=39 // pred_region
          %p252 = scmp.lt.s32.totalorder %s18, 1
          %s253 = scalar_select %p252, %s18, 1
          %s254 = smul.addr %s253, 2
          %s255 = smul.addr %s254, 8
          %s256 = scalar_lea.vmem %s0, %s255
        $region44: #{tpu_custom_call.1} parent=39 // pred_fallthru
          _
      $region40: #{tpu_custom_call.1} parent=5 // pred_fallthru
        _
      %p257 = scmp.le.s32.totalorder 1, %s18
      %p258 = scmp.lt.s32.totalorder %s18, 3
      %p259 = pnand %p257, %p258
      %p260 = pneg %p259
      // Predicated region
      $region45: #{tpu_custom_call.1} parent=5 // pred_check
        _
      $region46: #{tpu_custom_call.1} parent=5 // pred_check_branch
        %262 = sbr.rel (%p259) target = $region48
      $region47: #{tpu_custom_call.1} parent=5 // pred_region
        %s263 = ssub.s32 %s18, 1
        // Predicated region
        $region49: #{tpu_custom_call.1} parent=47 // pred_check
          %p264 = pneg %p65
        $region50: #{tpu_custom_call.1} parent=47 // pred_check_branch
          %266 = sbr.rel (%p264) target = $region52
        $region51: #{tpu_custom_call.1} parent=47 // pred_region
          %267 = dma.done [#allocation4], 128
        $region52: #{tpu_custom_call.1} parent=47 // pred_fallthru
          _
        // Predicated region
        $region53: #{tpu_custom_call.1} parent=47 // pred_check
          %p268 = pneg %p86
        $region54: #{tpu_custom_call.1} parent=47 // pred_check_branch
          %270 = sbr.rel (%p268) target = $region56
        $region55: #{tpu_custom_call.1} parent=47 // pred_region
          %271 = dma.done [#allocation7], 128
        $region56: #{tpu_custom_call.1} parent=47 // pred_fallthru
          _
        %p272 = scmp.lt.s32.totalorder %s23, 1
        %s273 = scalar_select %p272, %s23, 1
        %s274 = smul.addr %s273, 2
        %s275 = smul.addr %s274, 8
        %s276 = scalar_lea.vmem %s0, %s275
        %p277 = pneg %p44
        %p278 = pneg %p41
        %p279 = pneg %p65
        %p280 = pneg %p62
        %p281 = pneg %p86
        %p282 = pneg %p83
        %p283 = pneg %p107
        %p284 = pneg %p104
        %p285 = pneg %p128
        %p286 = pneg %p125
        %p287 = pneg %p149
        %p288 = pneg %p146
        %p289 = pneg %p170
        %p290 = pneg %p167
        %p291 = pneg %p196
        %p292 = pneg %p193
        %s293 = sand.u32 %s183, 1
        %s294 = scalar_lea.sflag [#allocation5], %s293
        %s295 = sand.u32 %s183, 1
        %s296 = smul.addr %s295, 32
        %s297 = scalar_lea.vmem [#allocation8], %s296
        %p298 = scmp.lt.s32.totalorder %s23, 1
        %s299 = scalar_select %p298, %s23, 1
        %s300 = smul.addr %s299, 2
        %s301 = smul.addr %s300, 8
        %s302 = scalar_lea.vmem %s0, %s301
        %v303 = vld [vmem:[%s302] sm:$0xff]
        %v304 = vld [vmem:[%s302 + $0x8] sm:$0xff]
        %v305 = vld [vmem:[#allocation3] sm:$0xff]
        %vm306 = vcmask 64512
        %v308 = vsel %vm306, %v305, 0
        %310 = vmatprep.subr.mxu0 0.0
        %311 = vmatpush1.msra.mxu0 0.0
        %312 = vmatprep.subr.mxu0 0.0
        %313 = vmatpush1.msra.mxu0 0.0
        %314 = vmatprep.subr.mxu0 0.0
        %315 = vmatpush1.msra.mxu0 0.0
        %316 = vmatprep.subr.mxu0 0.0
        %317 = vmatpush1.msra.mxu0 0.0
        %318 = vmatprep.subr.mxu0 0.0
        %319 = vmatpush1.msra.mxu0 0.0
        %320 = vmatprep.subr.mxu0 0.0
        %321 = vmatpush1.msra.mxu0 0.0
        %322 = vmatprep.subr.mxu0 0.0
        %323 = vmatpush1.msra.mxu0 0.0
        %324 = vmatprep.subr.mxu0 0.0
        %325 = vmatpush1.msra.mxu0 0.0
        %326 = vmatprep.subr.mxu0 0.0
        %327 = vmatpush1.msra.mxu0 0.0
        %328 = vmatprep.subr.mxu0 0.0
        %329 = vmatpush1.msra.mxu0 0.0
        %330 = vmatprep.subr.mxu0 0.0
        %331 = vmatpush1.msra.mxu0 0.0
        %332 = vmatprep.subr.mxu0 0.0
        %333 = vmatpush1.msra.mxu0 0.0
        %334 = vmatprep.subr.mxu0 0.0
        %335 = vmatpush1.msra.mxu0 0.0
        %336 = vmatprep.subr.mxu0 0.0
        %337 = vmatpush1.msra.mxu0 0.0
        %338 = vmatprep.subr.mxu0 0.0
        %339 = vmatpush1.msra.mxu0 0.0
        %340 = vmatprep.subr.mxu0 %v304
        %341 = vmatpush1.msra.mxu0 %v303
        %342 = vmatprep.subr.mxu0 0.0
        %343 = vmatpush2.msra.mxu0 0.0
        %344 = vmatprep.subr.mxu0 0.0
        %345 = vmatpush2.msra.mxu0 0.0
        %346 = vmatprep.subr.mxu0 0.0
        %347 = vmatpush2.msra.mxu0 0.0
        %348 = vmatprep.subr.mxu0 0.0
        %349 = vmatpush2.msra.mxu0 0.0
        %350 = vmatprep.subr.mxu0 0.0
        %351 = vmatpush2.msra.mxu0 0.0
        %352 = vmatprep.subr.mxu0 0.0
        %353 = vmatpush2.msra.mxu0 0.0
        %354 = vmatprep.subr.mxu0 0.0
        %355 = vmatpush2.msra.mxu0 0.0
        %356 = vmatprep.subr.mxu0 0.0
        %357 = vmatpush2.msra.mxu0 0.0
        %358 = vmatprep.subr.mxu0 0.0
        %359 = vmatpush2.msra.mxu0 0.0
        %360 = vmatprep.subr.mxu0 0.0
        %361 = vmatpush2.msra.mxu0 0.0
        %362 = vmatprep.subr.mxu0 0.0
        %363 = vmatpush2.msra.mxu0 0.0
        %364 = vmatprep.subr.mxu0 0.0
        %365 = vmatpush2.msra.mxu0 0.0
        %366 = vmatprep.subr.mxu0 0.0
        %367 = vmatpush2.msra.mxu0 0.0
        %368 = vmatprep.subr.mxu0 0.0
        %369 = vmatpush2.msra.mxu0 0.0
        %370 = vmatprep.subr.mxu0 0.0
        %371 = vmatpush2.msra.mxu0 0.0
        %372 = vmatprep.subr.mxu0 0.0
        %373 = vmatpush2.msra.mxu0 0.0
        %374 = vmatprep.mubr.f32.mxu0 0.0
        %375 = vmatmul.mubr.f32.gmra.mxu0 %v308
        %v376 = vpop.f32.mrf.mxu0
        %v377 = vadd.f32 0.0, %v376
        %v378 = vpop.f32.mrf.mxu0
        %v379 = vadd.f32 0.0, %v378
        %380 = vdwg.mxu0
        %v381 = vld [vmem:[%s3] sm:$0xff]
        %383 = vset.pattern.permute.xlu0 0
        %384 = vperm.xlu0 %383, %v381
        %v385 = vpop.permute.xlu0 %384
        %v387 = vmul.f32 %v377, %v385
        %v388 = vmul.f32 %v379, %v385
        %v389 = vld [vmem:[%s4] sm:$0xff]
        %391 = vset.pattern.permute.xlu0 0
        %392 = vperm.xlu0 %391, %v389
        %v393 = vpop.permute.xlu0 %392
        %v395 = vadd.f32 %v387, %v393
        %v396 = vadd.f32 %v388, %v393
        %v397 = vxor.u32 %v395, 2147483648
        %v398 = vxor.u32 %v396, 2147483648
        %v399 = vmul.f32 %v397, 1.442695
        %v400 = vpow.pop %v399
        %v401 = vmul.f32 %v398, 1.442695
        %v402 = vpow.pop %v401
        %v403 = vadd.f32 %v400, 1.0
        %v404 = vadd.f32 %v402, 1.0
        %v405 = vrcp.pop %v403
        %v406 = vmul.f32 1.0, %v405
        %v407 = vrcp.pop %v404
        %v408 = vmul.f32 1.0, %v407
        %v409 = vmul.f32 %v395, %v406
        %v410 = vmul.f32 %v396, %v408
        %411 = vst [vmem:[%s297] sm:$0xff] %v409
        %412 = vst [vmem:[%s297 + $0x8] sm:$0xff] %v410
        %413 = vst [vmem:[#allocation2] sm:$0xff] 0.0
        %414 = vst [vmem:[#allocation2 + $0x8] sm:$0xff] 0.0
        %vm415 = vcmask 556032
        %416 = vst.msk [vmem:[#allocation2 + $0x10] sm:$0xff] %vm415, 0.0
        %419 = vrot.lane.b32.xlu0 %v409, 34
        %v420 = vpop.permute.xlu0 %419
        %421 = vrot.lane.b32.xlu0 %v410, 34
        %v422 = vpop.permute.xlu0 %421
        %vm423 = vcmask 277504
        %v424 = vsel %vm423, %v420, %v422
        %vm428 = vcmask 1047824
        %429 = vst.msk [vmem:[#allocation2] sm:$0xff] %vm428, %v420
        %430 = vst [vmem:[#allocation2 + $0x8] sm:$0xff] %v424
        %431 = vst.msk [vmem:[#allocation2 + $0x10] sm:$0xff] %vm423, %v422
        %v432 = vld [vmem:[#allocation2] sm:$0xff]
        %v433 = vld [vmem:[#allocation2 + $0x8] sm:$0xff]
        %v434 = vld [vmem:[#allocation2 + $0x10] sm:$0xff]
        %v435 = vld [vmem:[#allocation6] sm:$0xff]
        %v436 = vlaneseq
        %v437 = vand.u32 %v436, 127
        %v438 = vadd.s32 %v437, 128
        %vm439 = vcmp.lt.s32.totalorder %v437, 0
        %v440 = vsub.s32 0, %v437
        %v441 = vsel %vm439, %v440, %v437
        %v442 = vshrl.u32 %v441, 4
        %v443 = vand.u32 %v441, 15
        %v444 = vsub.s32 0, %v443
        %v445 = vsel %vm439, %v444, %v443
        %vm446 = vcmp.lt.s32.totalorder %v438, 0
        %v447 = vsub.s32 0, %v438
        %v448 = vsel %vm446, %v447, %v438
        %v449 = vshrl.u32 %v448, 4
        %v450 = vand.u32 %v448, 15
        %v451 = vsub.s32 0, %v450
        %v452 = vsel %vm446, %v451, %v450
        %vm453 = vcmp.ne.s32.totalorder %v445, 0
        %vm454 = vcmp.ne.s32.totalorder %v452, 0
        %vm455 = vcmp.lt.s32.totalorder %v445, 0
        %vm456 = vcmp.lt.s32.totalorder %v452, 0
        %vm457 = vmand %vm455, %vm453
        %vm458 = vmand %vm456, %vm454
        %v459 = vadd.s32 %v445, 16
        %v460 = vadd.s32 %v452, 16
        %v461 = vsel %vm457, %v459, %v445
        %v462 = vsel %vm458, %v460, %v452
        %v463 = vadd.s32 %v461, 4294967294
        %v464 = vadd.s32 %v462, 4294967294
        %vm465 = vcmp.ge.s32.totalorder %v463, 0
        %vm466 = vcmp.ge.s32.totalorder %v464, 0
        %vm467 = vcmp.lt.s32.totalorder %v463, 16
        %vm468 = vcmp.lt.s32.totalorder %v464, 16
        %vm469 = vmand %vm465, %vm467
        %vm470 = vmand %vm466, %vm468
        %v471 = vsel %vm469, 1, 0
        %v472 = vsel %vm470, 1, 0
        %vm473 = vcmp.eq.s32.totalorder %v471, 1
        %vm474 = vcmp.eq.s32.totalorder %v472, 1
        %v475 = vsel %vm473, %v432, 0.0
        %v476 = vsel %vm474, %v433, 0.0
        %478 = vset.pattern.permute.xlu0 0
        %479 = vperm.xlu0 %478, %v435
        %v480 = vpop.permute.xlu0 %479
        %v482 = vmul.f32 %v480, %v475
        %v483 = vmul.f32 %v480, %v476
        %v484 = vadd.f32 %v482, 0.0
        %v485 = vadd.f32 %v483, 0.0
        %v486 = vadd.s32 %v461, 4294967295
        %v487 = vadd.s32 %v462, 4294967295
        %vm488 = vcmp.ge.s32.totalorder %v486, 0
        %vm489 = vcmp.ge.s32.totalorder %v487, 0
        %vm490 = vcmp.lt.s32.totalorder %v486, 16
        %vm491 = vcmp.lt.s32.totalorder %v487, 16
        %vm492 = vmand %vm488, %vm490
        %vm493 = vmand %vm489, %vm491
        %v494 = vsel %vm492, 1, 0
        %v495 = vsel %vm493, 1, 0
        %vm496 = vcmp.eq.s32.totalorder %v494, 1
        %vm497 = vcmp.eq.s32.totalorder %v495, 1
        %501 = vrot.lane.b32.xlu0 %v432, 127
        %v502 = vpop.permute.xlu0 %501
        %503 = vrot.lane.b32.xlu0 %v433, 127
        %v504 = vpop.permute.xlu0 %503
        %505 = vrot.lane.b32.xlu0 %v434, 127
        %v506 = vpop.permute.xlu0 %505
        %vm507 = vcmask 1039360
        %v508 = vsel %vm507, %v502, %v504
        %v509 = vsel %vm507, %v504, %v506
        %v512 = vsel %vm496, %v508, 0.0
        %v513 = vsel %vm497, %v509, 0.0
        %514 = vset.pattern.permute.xlu0 1
        %515 = vperm.xlu0 %514, %v435
        %v516 = vpop.permute.xlu0 %515
        %v518 = vmul.f32 %v516, %v512
        %v519 = vmul.f32 %v516, %v513
        %v520 = vadd.f32 %v484, %v518
        %v521 = vadd.f32 %v485, %v519
        %522 = vset.pattern.permute.xlu0 2
        %523 = vperm.xlu0 %522, %v435
        %v524 = vpop.permute.xlu0 %523
        %v526 = vmul.f32 %v524, %v432
        %v527 = vmul.f32 %v524, %v433
        %v528 = vmul.f32 %v524, %v434
        %532 = vrot.lane.b32.xlu0 %v526, 126
        %v533 = vpop.permute.xlu0 %532
        %534 = vrot.lane.b32.xlu0 %v527, 126
        %v535 = vpop.permute.xlu0 %534
        %536 = vrot.lane.b32.xlu0 %v528, 126
        %v537 = vpop.permute.xlu0 %536
        %vm538 = vcmask 1031168
        %v539 = vsel %vm538, %v533, %v535
        %v540 = vsel %vm538, %v535, %v537
        %v543 = vadd.f32 %v520, %v539
        %v544 = vadd.f32 %v521, %v540
        %v545 = vadd.s32 %v461, 1
        %v546 = vadd.s32 %v462, 1
        %vm547 = vcmp.ge.s32.totalorder %v545, 0
        %vm548 = vcmp.ge.s32.totalorder %v546, 0
        %vm549 = vcmp.lt.s32.totalorder %v545, 16
        %vm550 = vcmp.lt.s32.totalorder %v546, 16
        %vm551 = vmand %vm547, %vm549
        %vm552 = vmand %vm548, %vm550
        %v553 = vsel %vm551, 1, 0
        %v554 = vsel %vm552, 1, 0
        %vm555 = vcmp.eq.s32.totalorder %v553, 1
        %vm556 = vcmp.eq.s32.totalorder %v554, 1
        %557 = vrot.lane.b32.xlu0 %v432, 125
        %v558 = vpop.permute.xlu0 %557
        %559 = vrot.lane.b32.xlu0 %v433, 125
        %v560 = vpop.permute.xlu0 %559
        %561 = vrot.lane.b32.xlu0 %v434, 125
        %v562 = vpop.permute.xlu0 %561
        %vm563 = vcmask 1022976
        %v564 = vsel %vm563, %v558, %v560
        %v565 = vsel %vm563, %v560, %v562
        %v568 = vsel %vm555, %v564, 0.0
        %v569 = vsel %vm556, %v565, 0.0
        %570 = vset.pattern.permute.xlu0 3
        %571 = vperm.xlu0 %570, %v435
        %v572 = vpop.permute.xlu0 %571
        %v574 = vmul.f32 %v572, %v568
        %v575 = vmul.f32 %v572, %v569
        %v576 = vadd.f32 %v543, %v574
        %v577 = vadd.f32 %v544, %v575
        %v578 = vadd.s32 %v461, 2
        %v579 = vadd.s32 %v462, 2
        %vm580 = vcmp.ge.s32.totalorder %v578, 0
        %vm581 = vcmp.ge.s32.totalorder %v579, 0
        %vm582 = vcmp.lt.s32.totalorder %v578, 16
        %vm583 = vcmp.lt.s32.totalorder %v579, 16
        %vm584 = vmand %vm580, %vm582
        %vm585 = vmand %vm581, %vm583
        %v586 = vsel %vm584, 1, 0
        %v587 = vsel %vm585, 1, 0
        %vm588 = vcmp.eq.s32.totalorder %v586, 1
        %vm589 = vcmp.eq.s32.totalorder %v587, 1
        %590 = vrot.lane.b32.xlu0 %v432, 124
        %v591 = vpop.permute.xlu0 %590
        %592 = vrot.lane.b32.xlu0 %v433, 124
        %v593 = vpop.permute.xlu0 %592
        %594 = vrot.lane.b32.xlu0 %v434, 124
        %v595 = vpop.permute.xlu0 %594
        %vm596 = vcmask 1014784
        %v597 = vsel %vm596, %v591, %v593
        %v598 = vsel %vm596, %v593, %v595
        %v601 = vsel %vm588, %v597, 0.0
        %v602 = vsel %vm589, %v598, 0.0
        %603 = vset.pattern.permute.xlu0 4
        %604 = vperm.xlu0 %603, %v435
        %v605 = vpop.permute.xlu0 %604
        %v607 = vmul.f32 %v605, %v601
        %v608 = vmul.f32 %v605, %v602
        %v609 = vadd.f32 %v576, %v607
        %v610 = vadd.f32 %v577, %v608
        %611 = vrot.lane.b32.xlu0 %v432, 112
        %v612 = vpop.permute.xlu0 %611
        %613 = vrot.lane.b32.xlu0 %v433, 112
        %v614 = vpop.permute.xlu0 %613
        %615 = vrot.lane.b32.xlu0 %v434, 112
        %v616 = vpop.permute.xlu0 %615
        %vm617 = vcmask 916480
        %v618 = vsel %vm617, %v612, %v614
        %v619 = vsel %vm617, %v614, %v616
        %v622 = vsel %vm473, %v618, 0.0
        %v623 = vsel %vm474, %v619, 0.0
        %624 = vset.pattern.permute.xlu0 5
        %625 = vperm.xlu0 %624, %v435
        %v626 = vpop.permute.xlu0 %625
        %v628 = vmul.f32 %v626, %v622
        %v629 = vmul.f32 %v626, %v623
        %v630 = vadd.f32 %v609, %v628
        %v631 = vadd.f32 %v610, %v629
        %632 = vrot.lane.b32.xlu0 %v432, 111
        %v633 = vpop.permute.xlu0 %632
        %634 = vrot.lane.b32.xlu0 %v433, 111
        %v635 = vpop.permute.xlu0 %634
        %636 = vrot.lane.b32.xlu0 %v434, 111
        %v637 = vpop.permute.xlu0 %636
        %vm638 = vcmask 908288
        %v639 = vsel %vm638, %v633, %v635
        %v640 = vsel %vm638, %v635, %v637
        %v643 = vsel %vm496, %v639, 0.0
        %v644 = vsel %vm497, %v640, 0.0
        %645 = vset.pattern.permute.xlu0 6
        %646 = vperm.xlu0 %645, %v435
        %v647 = vpop.permute.xlu0 %646
        %v649 = vmul.f32 %v647, %v643
        %v650 = vmul.f32 %v647, %v644
        %v651 = vadd.f32 %v630, %v649
        %v652 = vadd.f32 %v631, %v650
        %653 = vset.pattern.permute.xlu0 7
        %654 = vperm.xlu0 %653, %v435
        %v655 = vpop.permute.xlu0 %654
        %v657 = vmul.f32 %v655, %v432
        %v658 = vmul.f32 %v655, %v433
        %v659 = vmul.f32 %v655, %v434
        %663 = vrot.lane.b32.xlu0 %v657, 110
        %v664 = vpop.permute.xlu0 %663
        %665 = vrot.lane.b32.xlu0 %v658, 110
        %v666 = vpop.permute.xlu0 %665
        %667 = vrot.lane.b32.xlu0 %v659, 110
        %v668 = vpop.permute.xlu0 %667
        %vm669 = vcmask 900096
        %v670 = vsel %vm669, %v664, %v666
        %v671 = vsel %vm669, %v666, %v668
        %v674 = vadd.f32 %v651, %v670
        %v675 = vadd.f32 %v652, %v671
        %676 = vrot.lane.b32.xlu0 %v432, 109
        %v677 = vpop.permute.xlu0 %676
        %678 = vrot.lane.b32.xlu0 %v433, 109
        %v679 = vpop.permute.xlu0 %678
        %680 = vrot.lane.b32.xlu0 %v434, 109
        %v681 = vpop.permute.xlu0 %680
        %vm682 = vcmask 891904
        %v683 = vsel %vm682, %v677, %v679
        %v684 = vsel %vm682, %v679, %v681
        %v687 = vsel %vm555, %v683, 0.0
        %v688 = vsel %vm556, %v684, 0.0
        %689 = vset.pattern.permute.xlu0 8
        %690 = vperm.xlu0 %689, %v435
        %v691 = vpop.permute.xlu0 %690
        %v693 = vmul.f32 %v691, %v687
        %v694 = vmul.f32 %v691, %v688
        %v695 = vadd.f32 %v674, %v693
        %v696 = vadd.f32 %v675, %v694
        %697 = vrot.lane.b32.xlu0 %v432, 108
        %v698 = vpop.permute.xlu0 %697
        %699 = vrot.lane.b32.xlu0 %v433, 108
        %v700 = vpop.permute.xlu0 %699
        %701 = vrot.lane.b32.xlu0 %v434, 108
        %v702 = vpop.permute.xlu0 %701
        %vm703 = vcmask 883712
        %v704 = vsel %vm703, %v698, %v700
        %v705 = vsel %vm703, %v700, %v702
        %v708 = vsel %vm588, %v704, 0.0
        %v709 = vsel %vm589, %v705, 0.0
        %710 = vset.pattern.permute.xlu0 9
        %711 = vperm.xlu0 %710, %v435
        %v712 = vpop.permute.xlu0 %711
        %v714 = vmul.f32 %v712, %v708
        %v715 = vmul.f32 %v712, %v709
        %v716 = vadd.f32 %v695, %v714
        %v717 = vadd.f32 %v696, %v715
        %718 = vrot.lane.b32.xlu0 %v432, 96
        %v719 = vpop.permute.xlu0 %718
        %720 = vrot.lane.b32.xlu0 %v433, 96
        %v721 = vpop.permute.xlu0 %720
        %722 = vrot.lane.b32.xlu0 %v434, 96
        %v723 = vpop.permute.xlu0 %722
        %vm724 = vcmask 785408
        %v725 = vsel %vm724, %v719, %v721
        %v726 = vsel %vm724, %v721, %v723
        %v729 = vsel %vm473, %v725, 0.0
        %v730 = vsel %vm474, %v726, 0.0
        %731 = vset.pattern.permute.xlu0 10
        %732 = vperm.xlu0 %731, %v435
        %v733 = vpop.permute.xlu0 %732
        %v735 = vmul.f32 %v733, %v729
        %v736 = vmul.f32 %v733, %v730
        %v737 = vadd.f32 %v716, %v735
        %v738 = vadd.f32 %v717, %v736
        %739 = vrot.lane.b32.xlu0 %v432, 95
        %v740 = vpop.permute.xlu0 %739
        %741 = vrot.lane.b32.xlu0 %v433, 95
        %v742 = vpop.permute.xlu0 %741
        %743 = vrot.lane.b32.xlu0 %v434, 95
        %v744 = vpop.permute.xlu0 %743
        %vm745 = vcmask 777216
        %v746 = vsel %vm745, %v740, %v742
        %v747 = vsel %vm745, %v742, %v744
        %v750 = vsel %vm496, %v746, 0.0
        %v751 = vsel %vm497, %v747, 0.0
        %752 = vset.pattern.permute.xlu0 11
        %753 = vperm.xlu0 %752, %v435
        %v754 = vpop.permute.xlu0 %753
        %v756 = vmul.f32 %v754, %v750
        %v757 = vmul.f32 %v754, %v751
        %v758 = vadd.f32 %v737, %v756
        %v759 = vadd.f32 %v738, %v757
        %760 = vset.pattern.permute.xlu0 12
        %761 = vperm.xlu0 %760, %v435
        %v762 = vpop.permute.xlu0 %761
        %v764 = vmul.f32 %v762, %v432
        %v765 = vmul.f32 %v762, %v433
        %v766 = vmul.f32 %v762, %v434
        %770 = vrot.lane.b32.xlu0 %v764, 94
        %v771 = vpop.permute.xlu0 %770
        %772 = vrot.lane.b32.xlu0 %v765, 94
        %v773 = vpop.permute.xlu0 %772
        %774 = vrot.lane.b32.xlu0 %v766, 94
        %v775 = vpop.permute.xlu0 %774
        %vm776 = vcmask 769024
        %v777 = vsel %vm776, %v771, %v773
        %v778 = vsel %vm776, %v773, %v775
        %v781 = vadd.f32 %v758, %v777
        %v782 = vadd.f32 %v759, %v778
        %783 = vrot.lane.b32.xlu0 %v432, 93
        %v784 = vpop.permute.xlu0 %783
        %785 = vrot.lane.b32.xlu0 %v433, 93
        %v786 = vpop.permute.xlu0 %785
        %787 = vrot.lane.b32.xlu0 %v434, 93
        %v788 = vpop.permute.xlu0 %787
        %vm789 = vcmask 760832
        %v790 = vsel %vm789, %v784, %v786
        %v791 = vsel %vm789, %v786, %v788
        %v794 = vsel %vm555, %v790, 0.0
        %v795 = vsel %vm556, %v791, 0.0
        %796 = vset.pattern.permute.xlu0 13
        %797 = vperm.xlu0 %796, %v435
        %v798 = vpop.permute.xlu0 %797
        %v800 = vmul.f32 %v798, %v794
        %v801 = vmul.f32 %v798, %v795
        %v802 = vadd.f32 %v781, %v800
        %v803 = vadd.f32 %v782, %v801
        %804 = vrot.lane.b32.xlu0 %v432, 92
        %v805 = vpop.permute.xlu0 %804
        %806 = vrot.lane.b32.xlu0 %v433, 92
        %v807 = vpop.permute.xlu0 %806
        %808 = vrot.lane.b32.xlu0 %v434, 92
        %v809 = vpop.permute.xlu0 %808
        %vm810 = vcmask 752640
        %v811 = vsel %vm810, %v805, %v807
        %v812 = vsel %vm810, %v807, %v809
        %v815 = vsel %vm588, %v811, 0.0
        %v816 = vsel %vm589, %v812, 0.0
        %817 = vset.pattern.permute.xlu0 14
        %818 = vperm.xlu0 %817, %v435
        %v819 = vpop.permute.xlu0 %818
        %v821 = vmul.f32 %v819, %v815
        %v822 = vmul.f32 %v819, %v816
        %v823 = vadd.f32 %v802, %v821
        %v824 = vadd.f32 %v803, %v822
        %825 = vrot.lane.b32.xlu0 %v432, 80
        %v826 = vpop.permute.xlu0 %825
        %827 = vrot.lane.b32.xlu0 %v433, 80
        %v828 = vpop.permute.xlu0 %827
        %829 = vrot.lane.b32.xlu0 %v434, 80
        %v830 = vpop.permute.xlu0 %829
        %vm831 = vcmask 654336
        %v832 = vsel %vm831, %v826, %v828
        %v833 = vsel %vm831, %v828, %v830
        %v836 = vsel %vm473, %v832, 0.0
        %v837 = vsel %vm474, %v833, 0.0
        %838 = vset.pattern.permute.xlu0 15
        %839 = vperm.xlu0 %838, %v435
        %v840 = vpop.permute.xlu0 %839
        %v842 = vmul.f32 %v840, %v836
        %v843 = vmul.f32 %v840, %v837
        %v844 = vadd.f32 %v823, %v842
        %v845 = vadd.f32 %v824, %v843
        %846 = vrot.lane.b32.xlu0 %v432, 79
        %v847 = vpop.permute.xlu0 %846
        %848 = vrot.lane.b32.xlu0 %v433, 79
        %v849 = vpop.permute.xlu0 %848
        %850 = vrot.lane.b32.xlu0 %v434, 79
        %v851 = vpop.permute.xlu0 %850
        %vm852 = vcmask 646144
        %v853 = vsel %vm852, %v847, %v849
        %v854 = vsel %vm852, %v849, %v851
        %v857 = vsel %vm496, %v853, 0.0
        %v858 = vsel %vm497, %v854, 0.0
        %859 = vset.pattern.permute.xlu0 16
        %860 = vperm.xlu0 %859, %v435
        %v861 = vpop.permute.xlu0 %860
        %v863 = vmul.f32 %v861, %v857
        %v864 = vmul.f32 %v861, %v858
        %v865 = vadd.f32 %v844, %v863
        %v866 = vadd.f32 %v845, %v864
        %867 = vset.pattern.permute.xlu0 17
        %868 = vperm.xlu0 %867, %v435
        %v869 = vpop.permute.xlu0 %868
        %v871 = vmul.f32 %v869, %v432
        %v872 = vmul.f32 %v869, %v433
        %v873 = vmul.f32 %v869, %v434
        %877 = vrot.lane.b32.xlu0 %v871, 78
        %v878 = vpop.permute.xlu0 %877
        %879 = vrot.lane.b32.xlu0 %v872, 78
        %v880 = vpop.permute.xlu0 %879
        %881 = vrot.lane.b32.xlu0 %v873, 78
        %v882 = vpop.permute.xlu0 %881
        %vm883 = vcmask 637952
        %v884 = vsel %vm883, %v878, %v880
        %v885 = vsel %vm883, %v880, %v882
        %v888 = vadd.f32 %v865, %v884
        %v889 = vadd.f32 %v866, %v885
        %890 = vrot.lane.b32.xlu0 %v432, 77
        %v891 = vpop.permute.xlu0 %890
        %892 = vrot.lane.b32.xlu0 %v433, 77
        %v893 = vpop.permute.xlu0 %892
        %894 = vrot.lane.b32.xlu0 %v434, 77
        %v895 = vpop.permute.xlu0 %894
        %vm896 = vcmask 629760
        %v897 = vsel %vm896, %v891, %v893
        %v898 = vsel %vm896, %v893, %v895
        %v901 = vsel %vm555, %v897, 0.0
        %v902 = vsel %vm556, %v898, 0.0
        %903 = vset.pattern.permute.xlu0 18
        %904 = vperm.xlu0 %903, %v435
        %v905 = vpop.permute.xlu0 %904
        %v907 = vmul.f32 %v905, %v901
        %v908 = vmul.f32 %v905, %v902
        %v909 = vadd.f32 %v888, %v907
        %v910 = vadd.f32 %v889, %v908
        %911 = vrot.lane.b32.xlu0 %v432, 76
        %v912 = vpop.permute.xlu0 %911
        %913 = vrot.lane.b32.xlu0 %v433, 76
        %v914 = vpop.permute.xlu0 %913
        %915 = vrot.lane.b32.xlu0 %v434, 76
        %v916 = vpop.permute.xlu0 %915
        %vm917 = vcmask 621568
        %v918 = vsel %vm917, %v912, %v914
        %v919 = vsel %vm917, %v914, %v916
        %v922 = vsel %vm588, %v918, 0.0
        %v923 = vsel %vm589, %v919, 0.0
        %924 = vset.pattern.permute.xlu0 19
        %925 = vperm.xlu0 %924, %v435
        %v926 = vpop.permute.xlu0 %925
        %v928 = vmul.f32 %v926, %v922
        %v929 = vmul.f32 %v926, %v923
        %v930 = vadd.f32 %v909, %v928
        %v931 = vadd.f32 %v910, %v929
        %932 = vrot.lane.b32.xlu0 %v432, 64
        %v933 = vpop.permute.xlu0 %932
        %934 = vrot.lane.b32.xlu0 %v433, 64
        %v935 = vpop.permute.xlu0 %934
        %936 = vrot.lane.b32.xlu0 %v434, 64
        %v937 = vpop.permute.xlu0 %936
        %vm938 = vcmask 523264
        %v939 = vsel %vm938, %v933, %v935
        %v940 = vsel %vm938, %v935, %v937
        %v943 = vsel %vm473, %v939, 0.0
        %v944 = vsel %vm474, %v940, 0.0
        %945 = vset.pattern.permute.xlu0 20
        %946 = vperm.xlu0 %945, %v435
        %v947 = vpop.permute.xlu0 %946
        %v949 = vmul.f32 %v947, %v943
        %v950 = vmul.f32 %v947, %v944
        %v951 = vadd.f32 %v930, %v949
        %v952 = vadd.f32 %v931, %v950
        %953 = vrot.lane.b32.xlu0 %v432, 63
        %v954 = vpop.permute.xlu0 %953
        %955 = vrot.lane.b32.xlu0 %v433, 63
        %v956 = vpop.permute.xlu0 %955
        %957 = vrot.lane.b32.xlu0 %v434, 63
        %v958 = vpop.permute.xlu0 %957
        %vm959 = vcmask 515072
        %v960 = vsel %vm959, %v954, %v956
        %v961 = vsel %vm959, %v956, %v958
        %v964 = vsel %vm496, %v960, 0.0
        %v965 = vsel %vm497, %v961, 0.0
        %966 = vset.pattern.permute.xlu0 21
        %967 = vperm.xlu0 %966, %v435
        %v968 = vpop.permute.xlu0 %967
        %v970 = vmul.f32 %v968, %v964
        %v971 = vmul.f32 %v968, %v965
        %v972 = vadd.f32 %v951, %v970
        %v973 = vadd.f32 %v952, %v971
        %974 = vset.pattern.permute.xlu0 22
        %975 = vperm.xlu0 %974, %v435
        %v976 = vpop.permute.xlu0 %975
        %v978 = vmul.f32 %v976, %v432
        %v979 = vmul.f32 %v976, %v433
        %v980 = vmul.f32 %v976, %v434
        %984 = vrot.lane.b32.xlu0 %v978, 62
        %v985 = vpop.permute.xlu0 %984
        %986 = vrot.lane.b32.xlu0 %v979, 62
        %v987 = vpop.permute.xlu0 %986
        %988 = vrot.lane.b32.xlu0 %v980, 62
        %v989 = vpop.permute.xlu0 %988
        %vm990 = vcmask 506880
        %v991 = vsel %vm990, %v985, %v987
        %v992 = vsel %vm990, %v987, %v989
        %v995 = vadd.f32 %v972, %v991
        %v996 = vadd.f32 %v973, %v992
        %997 = vrot.lane.b32.xlu0 %v432, 61
        %v998 = vpop.permute.xlu0 %997
        %999 = vrot.lane.b32.xlu0 %v433, 61
        %v1000 = vpop.permute.xlu0 %999
        %1001 = vrot.lane.b32.xlu0 %v434, 61
        %v1002 = vpop.permute.xlu0 %1001
        %vm1003 = vcmask 498688
        %v1004 = vsel %vm1003, %v998, %v1000
        %v1005 = vsel %vm1003, %v1000, %v1002
        %v1008 = vsel %vm555, %v1004, 0.0
        %v1009 = vsel %vm556, %v1005, 0.0
        %1010 = vset.pattern.permute.xlu0 23
        %1011 = vperm.xlu0 %1010, %v435
        %v1012 = vpop.permute.xlu0 %1011
        %v1014 = vmul.f32 %v1012, %v1008
        %v1015 = vmul.f32 %v1012, %v1009
        %v1016 = vadd.f32 %v995, %v1014
        %v1017 = vadd.f32 %v996, %v1015
        %1018 = vrot.lane.b32.xlu0 %v432, 60
        %v1019 = vpop.permute.xlu0 %1018
        %1020 = vrot.lane.b32.xlu0 %v433, 60
        %v1021 = vpop.permute.xlu0 %1020
        %1022 = vrot.lane.b32.xlu0 %v434, 60
        %v1023 = vpop.permute.xlu0 %1022
        %vm1024 = vcmask 490496
        %v1025 = vsel %vm1024, %v1019, %v1021
        %v1026 = vsel %vm1024, %v1021, %v1023
        %v1029 = vsel %vm588, %v1025, 0.0
        %v1030 = vsel %vm589, %v1026, 0.0
        %1031 = vset.pattern.permute.xlu0 24
        %1032 = vperm.xlu0 %1031, %v435
        %v1033 = vpop.permute.xlu0 %1032
        %v1035 = vmul.f32 %v1033, %v1029
        %v1036 = vmul.f32 %v1033, %v1030
        %v1037 = vadd.f32 %v1016, %v1035
        %v1038 = vadd.f32 %v1017, %v1036
        %v1039 = vld [vmem:[%s5] sm:$0xff]
        %1041 = vset.pattern.permute.xlu0 0
        %1042 = vperm.xlu0 %1041, %v1039
        %v1043 = vpop.permute.xlu0 %1042
        %v1045 = vmul.f32 %v1037, %v1043
        %v1046 = vmul.f32 %v1038, %v1043
        %v1047 = vld [vmem:[%s6] sm:$0xff]
        %1049 = vset.pattern.permute.xlu0 0
        %1050 = vperm.xlu0 %1049, %v1047
        %v1051 = vpop.permute.xlu0 %1050
        %v1053 = vadd.f32 %v1045, %v1051
        %v1054 = vadd.f32 %v1046, %v1051
        %v1055 = vxor.u32 %v1053, 2147483648
        %v1056 = vxor.u32 %v1054, 2147483648
        %v1057 = vmul.f32 %v1055, 1.442695
        %v1058 = vpow.pop %v1057
        %v1059 = vmul.f32 %v1056, 1.442695
        %v1060 = vpow.pop %v1059
        %v1061 = vadd.f32 %v1058, 1.0
        %v1062 = vadd.f32 %v1060, 1.0
        %v1063 = vrcp.pop %v1061
        %v1064 = vmul.f32 1.0, %v1063
        %v1065 = vrcp.pop %v1062
        %v1066 = vmul.f32 1.0, %v1065
        %v1067 = vmul.f32 %v1053, %v1064
        %v1068 = vmul.f32 %v1054, %v1066
        %1069 = vst [vmem:[%s297 + $0x10] sm:$0xff] %v1067
        %1070 = vst [vmem:[%s297 + $0x18] sm:$0xff] %v1068
        %s1071 = sand.u32 %s183, 1
        %s1072 = scalar_lea.sflag [#allocation5], %s1071
        %s1073 = sand.u32 %s183, 1
        %s1074 = smul.addr %s1073, 32
        %s1075 = scalar_lea.vmem [#allocation8], %s1074
        // Predicated region
        $region57: #{tpu_custom_call.1} parent=47 // pred_check
          %p1076 = pneg %p193
        $region58: #{tpu_custom_call.1} parent=47 // pred_check_branch
          %1078 = sbr.rel (%p1076) target = $region60
        $region59: #{tpu_custom_call.1} parent=47 // pred_region
          %s1080 = ssub.s32 512, 512
          %1081 = vsyncadd %s1072, %s1080
          %s1082 = smul.addr %s23, 4
          %s1083 = smul.addr %s1082, 128
          %s1084 = scalar_lea.hbm %s7, %s1083
          %s1085 = sshll.u32 %s1075, 4
          %s1086 = int_to_ptr.vmem [resolvable:$true] %s1085
          %1091 = dma.vmem_to_hbm [thread:$0]  %s1086, 512, %s1084, %s1072, 256, 256, 16
        $region60: #{tpu_custom_call.1} parent=47 // pred_fallthru
          _
      $region48: #{tpu_custom_call.1} parent=5 // pred_fallthru
        _
      %p1092 = scmp.le.s32.totalorder 2, %s18
      // Predicated region
      $region61: #{tpu_custom_call.1} parent=5 // pred_check
        %p1093 = pneg %p1092
      $region62: #{tpu_custom_call.1} parent=5 // pred_check_branch
        %1095 = sbr.rel (%p1093) target = $region64
      $region63: #{tpu_custom_call.1} parent=5 // pred_region
        %s1096 = ssub.s32 %s18, 2
        // Predicated region
        $region65: #{tpu_custom_call.1} parent=63 // pred_check
          %p1097 = pneg %p199
        $region66: #{tpu_custom_call.1} parent=63 // pred_check_branch
          %1099 = sbr.rel (%p1097) target = $region68
        $region67: #{tpu_custom_call.1} parent=63 // pred_region
          %s1100 = sand.u32 %s184, 1
          %s1101 = scalar_lea.sflag [#allocation5], %s1100
          %s1102 = sand.u32 %s184, 1
          %s1103 = smul.addr %s1102, 32
          %s1104 = scalar_lea.vmem [#allocation8], %s1103
          %1105 = dma.done %s1101, 512
        $region68: #{tpu_custom_call.1} parent=63 // pred_fallthru
          _
      $region64: #{tpu_custom_call.1} parent=5 // pred_fallthru
        _
    $region6: #{tpu_custom_call.1} parent=1 // loop_footer
      %s22 = sadd.s32 1, %s18
    $region7: #{tpu_custom_call.1} parent=1 // loop_footer_branch
      %17 = sbr.rel target = $region3
    $region8: #{tpu_custom_call.1} parent=1 // loop_exit
      _
    %1106 = vsyncpa [#allocation4], 1
    %s1107 = scalar_lea.sflag [#allocation4], 1
    %1108 = vsyncpa %s1107, 1
    %1109 = vsyncpa [#allocation7], 1
    %1110 = vsyncpa [#allocation5], 1
    %s1111 = scalar_lea.sflag [#allocation5], 1
    %1112 = vsyncpa %s1111, 1

</llo_original>
